<compile_context>
chip_gen: v5e
topology: v5e:2x2
jax: 0.10.0
libtpu: 0.0.40
codegen_flags: <defaults>
</compile_context>

<pallas_src>
import functools

import jax
import jax.numpy as jnp
from jax import lax
from jax.experimental import pallas as pl
from jax.experimental.pallas import tpu as pltpu

LANE = 128                       # channel dims padded to a multiple of this
SUBLANE = 8
MAX_TILE_T = 1024                # time-rows per Pallas block (M tiling)

_VMEM_LIMIT_CACHE = None


def _vmem_limit_bytes():
    """~75% of physical VMEM, capped at 96 MiB (96 MiB on v5e/v6e, 48 MiB on v7x)."""
    global _VMEM_LIMIT_CACHE
    if _VMEM_LIMIT_CACHE is None:
        cap = 128 * 1024 * 1024
        try:
            cap = int(pltpu.get_tpu_info().vmem_capacity_bytes)
        except Exception:
            pass
        _VMEM_LIMIT_CACHE = int(min(96 * 1024 * 1024, (cap * 3) // 4))
    return _VMEM_LIMIT_CACHE


def _round_up(x, m):
    return ((x + m - 1) // m) * m


def _tiling(n):
    """Balanced time tiling -> (tile, num_tiles); tile is a multiple of 8 and
    total padding stays < 8 rows per tile (no round-up-to-512 blow-up)."""
    n = max(int(n), 1)
    if n <= MAX_TILE_T:
        return _round_up(n, SUBLANE), 1
    nt = -(-n // MAX_TILE_T)
    tile = _round_up(-(-n // nt), SUBLANE)
    return tile, -(-n // tile)


def _extract_windows(arr, nt, step, win):
    """(B, T, C) -> (B, nt, win, C); window j = rows [j*step, j*step+win).
    Zero-pads T so every window is in-bounds.  Only the halo (win - step) rows
    are duplicated, so each conv grid step sees an O(tile) VMEM block."""
    need = (nt - 1) * step + win
    if arr.shape[1] < need:
        arr = jnp.pad(arr, ((0, 0), (0, need - arr.shape[1]), (0, 0)))
    if nt == 1:
        return arr[:, None, :win, :]
    return jnp.stack(
        [lax.dynamic_slice_in_dim(arr, j * step, win, axis=1) for j in range(nt)],
        axis=1)


# ----------------------------------------------------------------------------
# Pallas kernels
# ----------------------------------------------------------------------------
def _conv1_kernel(xw_ref, w_ref, b_ref, o_ref, *, tile_t, k_taps, dilation):
    """Fused conv1: stride-2 K-tap gather from the (win, Cin) x window, per-tap
    MXU dots accumulated in f32, bias + ReLU, bf16 store."""
    acc = jnp.dot(xw_ref[pl.ds(0, tile_t, stride=2), :], w_ref[0],
                  preferred_element_type=jnp.float32)
    for k in range(1, k_taps):
        acc = acc + jnp.dot(xw_ref[pl.ds(k * dilation, tile_t, stride=2), :],
                            w_ref[k], preferred_element_type=jnp.float32)
    o_ref[...] = jnp.maximum(acc + b_ref[...], 0.0).astype(o_ref.dtype)


def _conv1(x_win, w_k, bias, *, tile_t, k_taps, dilation, out_len, vmem):
    B, nt, win, cin = x_win.shape
    n_out = w_k.shape[-1]
    kernel = functools.partial(_conv1_kernel, tile_t=tile_t, k_taps=k_taps,
                               dilation=dilation)
    flops = 2 * B * out_len * k_taps * cin * n_out
    bytes_acc = int(x_win.size * 4 + w_k.size * 4 + bias.size * 4
                    + B * out_len * n_out * 2)
    return pl.pallas_call(
        kernel,
        out_shape=jax.ShapeDtypeStruct((B, out_len, n_out), jnp.bfloat16),
        grid=(B, nt),
        in_specs=[
            pl.BlockSpec((None, None, win, cin), lambda b, j: (b, j, 0, 0)),
            pl.BlockSpec((k_taps, cin, n_out), lambda b, j: (0, 0, 0)),  # resident
            pl.BlockSpec((1, n_out), lambda b, j: (0, 0)),               # resident
        ],
        out_specs=pl.BlockSpec((None, tile_t, n_out), lambda b, j: (b, j, 0)),
        compiler_params=pltpu.CompilerParams(
            dimension_semantics=("parallel", "parallel"),
            vmem_limit_bytes=vmem),
        cost_estimate=pl.CostEstimate(flops=flops, transcendentals=0,
                                      bytes_accessed=bytes_acc),
    )(x_win, w_k, bias)


def _conv2_kernel(aw_ref, w_ref, b_ref, xr_ref, wd_ref, bd_ref,
                  y_ref, sum_ref, ssq_ref,
                  *, tile_t, k_taps, dilation, valid_last, has_pad):
    """Fused conv2 (K-tap gather from halo window) + bias + ReLU2 + residual
    (1x1/identity conv) add, plus per-batch partial sum / sum-sq for BN."""
    j = pl.program_id(1)

    @pl.when(j == 0)
    def _():
        sum_ref[...] = jnp.zeros_like(sum_ref)
        ssq_ref[...] = jnp.zeros_like(ssq_ref)

    aw = aw_ref[...]                                       # one bf16 window load
    acc = jnp.dot(aw[0:tile_t, :], w_ref[0], preferred_element_type=jnp.float32)
    for k in range(1, k_taps):                             # static unroll over taps
        off = k * dilation
        acc = acc + jnp.dot(aw[off:off + tile_t, :], w_ref[k],
                            preferred_element_type=jnp.float32)
    acc = jnp.maximum(acc + b_ref[...], 0.0)               # conv2 bias + ReLU2
    res = jnp.dot(xr_ref[...], wd_ref[...],
                  preferred_element_type=jnp.float32) + bd_ref[...]
    y = acc + res                                          # fused residual add (f32)
    y_ref[...] = y.astype(y_ref.dtype)                     # bf16 store

    def _accumulate(v):
        sum_ref[...] += jnp.sum(v, axis=0, keepdims=True)
        ssq_ref[...] += jnp.sum(v * v, axis=0, keepdims=True)

    if not has_pad:                                        # static: no padded rows
        _accumulate(y)
    else:                                                  # mask only the last tile
        last = pl.num_programs(1) - 1

        @pl.when(j != last)
        def _():
            _accumulate(y)

        @pl.when(j == last)
        def _():
            row = lax.broadcasted_iota(jnp.int32, y.shape, 0)
            _accumulate(jnp.where(row < valid_last, y, 0.0))


def _conv2(act_win, w_k, bias, x_res, wd, bd, *, tile_t, k_taps, dilation,
           n_valid, vmem):
    B, nt, win, n_out = act_win.shape
    c_res = x_res.shape[-1]
    out_len = nt * tile_t
    has_pad = out_len != n_valid
    valid_last = n_valid - (nt - 1) * tile_t
    kernel = functools.partial(_conv2_kernel, tile_t=tile_t, k_taps=k_taps,
                               dilation=dilation, valid_last=valid_last,
                               has_pad=has_pad)
    flops = 2 * B * out_len * n_out * (k_taps * n_out + c_res)
    bytes_acc = int(act_win.size * 2 + w_k.size * 2 + x_res.size * 4
                    + wd.size * 4 + B * out_len * n_out * 2 + 2 * B * n_out * 4)
    return pl.pallas_call(
        kernel,
        out_shape=(
            jax.ShapeDtypeStruct((B, out_len, n_out), jnp.bfloat16),  # relu(conv2)+res
            jax.ShapeDtypeStruct((B, 1, n_out), jnp.float32),         # per-batch sum
            jax.ShapeDtypeStruct((B, 1, n_out), jnp.float32),         # per-batch sum^2
        ),
        grid=(B, nt),
        in_specs=[
            pl.BlockSpec((None, None, win, n_out), lambda b, j: (b, j, 0, 0)),
            pl.BlockSpec((k_taps, n_out, n_out), lambda b, j: (0, 0, 0)),  # resident
            pl.BlockSpec((1, n_out), lambda b, j: (0, 0)),
            pl.BlockSpec((None, tile_t, c_res), lambda b, j: (b, j, 0)),
            pl.BlockSpec((c_res, n_out), lambda b, j: (0, 0)),
            pl.BlockSpec((1, n_out), lambda b, j: (0, 0)),
        ],
        out_specs=(
            pl.BlockSpec((None, tile_t, n_out), lambda b, j: (b, j, 0)),
            pl.BlockSpec((None, 1, n_out), lambda b, j: (b, 0, 0)),
            pl.BlockSpec((None, 1, n_out), lambda b, j: (b, 0, 0)),
        ),
        compiler_params=pltpu.CompilerParams(
            # per-batch BN accumulators only revisit across the time axis, so the
            # batch axis stays "parallel" (v7x megacore), time is "arbitrary".
            dimension_semantics=("parallel", "arbitrary"),
            vmem_limit_bytes=vmem),
        cost_estimate=pl.CostEstimate(flops=flops, transcendentals=0,
                                      bytes_accessed=bytes_acc),
    )(act_win, w_k, bias, x_res, wd, bd)


def _bn_relu_kernel(y_ref, sc_ref, sh_ref, o_ref, *, n_keep, transpose_out):
    v = jnp.maximum(y_ref[...].astype(jnp.float32) * sc_ref[...] + sh_ref[...], 0.0)
    if transpose_out:
        o_ref[...] = jnp.transpose(v)[:n_keep, :]   # NLC tile -> NCL tile in-kernel
    else:
        o_ref[...] = v


def _bn_relu(y, scale, shift, *, tile_t, n_keep, vmem):
    B, out_len, n_out = y.shape
    nt = out_len // tile_t
    # fused in-kernel transpose needs a lane dim that is a multiple of 128 (or the
    # whole padded time axis); otherwise fall back to an XLA transpose outside.
    fuse_t = (nt == 1) or (tile_t % LANE == 0)
    kernel = functools.partial(_bn_relu_kernel, n_keep=n_keep, transpose_out=fuse_t)
    if fuse_t:
        out_shape = jax.ShapeDtypeStruct((B, n_keep, out_len), jnp.float32)
        out_spec = pl.BlockSpec((None, n_keep, tile_t), lambda b, j: (b, 0, j))
    else:
        out_shape = jax.ShapeDtypeStruct((B, out_len, n_out), jnp.float32)
        out_spec = pl.BlockSpec((None, tile_t, n_out), lambda b, j: (b, j, 0))
    out = pl.pallas_call(
        kernel,
        out_shape=out_shape,
        grid=(B, nt),
        in_specs=[
            pl.BlockSpec((None, tile_t, n_out), lambda b, j: (b, j, 0)),
            pl.BlockSpec((1, n_out), lambda b, j: (0, 0)),
            pl.BlockSpec((1, n_out), lambda b, j: (0, 0)),
        ],
        out_specs=out_spec,
        compiler_params=pltpu.CompilerParams(
            dimension_semantics=("parallel", "parallel"),
            vmem_limit_bytes=vmem),
    )(y, scale, shift)
    return out, fuse_t


# ----------------------------------------------------------------------------
# Plain-JAX glue
# ----------------------------------------------------------------------------
def _weight_norm(v, g):
    """PyTorch weight_norm (dim=0): w = g * v / ||v||_(cin,k) per output channel."""
    norm = jnp.sqrt(jnp.sum(v * v, axis=(1, 2), keepdims=True))
    return v * (g.reshape(-1, 1, 1) / norm)


# ----------------------------------------------------------------------------
# Forward pass
# ----------------------------------------------------------------------------
def hr_temporal_block_forward(params, x, pad, kernel_size, dilation):
    # x: (B, n_inputs, L)  -- PyTorch NCL
    B, Cin, L = x.shape
    K = kernel_size
    d = dilation
    pad_l, pad_r = pad
    p2 = int(d * (K - 1) / 2)
    vmem = _vmem_limit_bytes()

    w1 = _weight_norm(params["conv1_v"], params["conv1_g"])   # (Cout, Cin, K)
    w2 = _weight_norm(params["conv2_v"], params["conv2_g"])   # (Cout, Cout, K)
    Cout = w1.shape[0]
    Np = _round_up(Cout, LANE)                                # lane-dense channels

    x_nlc = jnp.transpose(x, (0, 2, 1)).astype(jnp.float32)   # NCL -> NLC once

    # ---- conv1 (stride 2, padding 0) + ReLU1; dropout1 = identity -----------
    # TODO(synk): nn.Dropout is stochastic; implemented as identity (eval mode).
    L1 = (L - d * (K - 1) - 1) // 2 + 1
    tile1, nt1 = _tiling(L1)
    L1p = tile1 * nt1
    win1 = _round_up(2 * (tile1 - 1) + d * (K - 1) + 1, SUBLANE)
    x_win = _extract_windows(x_nlc, nt1, 2 * tile1, win1)     # (B, nt1, win1, Cin)
    w1_k = jnp.pad(jnp.transpose(w1, (2, 1, 0)),              # (K, Cin, Np) f32
                   ((0, 0), (0, 0), (0, Np - Cout)))
    b1 = jnp.pad(params["conv1_b"], (0, Np - Cout)).reshape(1, Np)
    out1 = _conv1(x_win, w1_k, b1, tile_t=tile1, k_taps=K, dilation=d,
                  out_len=L1p, vmem=vmem)                     # (B, L1p, Np) bf16

    # ---- F.pad(out, pad) + conv2's symmetric padding, channels-last, bf16 ---
    L2 = L1 + pad_l + pad_r + 2 * p2 - d * (K - 1)
    tile2, nt2 = _tiling(L2)
    L2p = tile2 * nt2
    win2 = _round_up(tile2 + d * (K - 1), SUBLANE)
    act_len = (nt2 - 1) * tile2 + win2
    act = jnp.pad(out1[:, :L1, :],
                  ((0, 0), (pad_l + p2, act_len - (pad_l + p2) - L1), (0, 0)))
    act_win = _extract_windows(act, nt2, tile2, win2)         # (B, nt2, win2, Np) bf16
    w2_k = jnp.pad(jnp.transpose(w2, (2, 1, 0)),              # (K, Np, Np) bf16
                   ((0, 0), (0, Np - Cout), (0, Np - Cout))).astype(jnp.bfloat16)
    b2 = jnp.pad(params["conv2_b"], (0, Np - Cout)).reshape(1, Np)

    # ---- residual path, fused into the conv2 kernel (no HBM round trip) -----
    if Cin != Cout:
        x_ds = x_nlc[:, ::2, :]                               # 1x1 conv, stride 2
        Ld = x_ds.shape[1]
        assert Ld == L2, f"residual length mismatch: {Ld} vs {L2}"
        x_res = jnp.pad(x_ds, ((0, 0), (0, L2p - Ld), (0, 0)))        # (B, L2p, Cin)
        wd = jnp.pad(jnp.transpose(params["down_w"][:, :, 0]),        # (Cin, Np)
                     ((0, 0), (0, Np - Cout)))
        bd = jnp.pad(params["down_b"], (0, Np - Cout)).reshape(1, Np)
    else:
        assert L == L2, f"residual length mismatch: {L} vs {L2}"
        x_res = jnp.pad(x_nlc, ((0, 0), (0, L2p - L), (0, Np - Cin)))  # identity res
        wd = jnp.eye(Np, dtype=jnp.float32)
        bd = jnp.zeros((1, Np), jnp.float32)

    # ---- fused conv2 + ReLU2 + residual add + per-batch BN partials ---------
    y, s, ss = _conv2(act_win, w2_k, b2, x_res, wd, bd, tile_t=tile2, k_taps=K,
                      dilation=d, n_valid=L2, vmem=vmem)

    # ---- BatchNorm1d (batch statistics, biased variance) + final ReLU -------
    # TODO(synk): running_mean/var buffers are not tracked (training-mode norm).
    count = float(B * L2)
    mean = jnp.sum(s, axis=0) / count                         # (1, Np)
    var = jnp.maximum(jnp.sum(ss, axis=0) / count - mean * mean, 0.0)
    gamma = jnp.pad(params["bn_gamma"], (0, Np - Cout),
                    constant_values=1.0).reshape(1, Np)
    beta = jnp.pad(params["bn_beta"], (0, Np - Cout)).reshape(1, Np)
    scale = gamma * lax.rsqrt(var + 1e-5)
    shift = beta - mean * scale
    out, fused_t = _bn_relu(y, scale, shift, tile_t=tile2, n_keep=Cout, vmem=vmem)
    # dropout2 / dropout3 = identity (eval mode)

    if fused_t:
        return out if L2p == L2 else out[:, :, :L2]           # already (B, Cout, L2)
    return jnp.transpose(out[:, :L2, :Cout], (0, 2, 1))       # fallback NLC -> NCL


# ----------------------------------------------------------------------------
# Deterministic parameter initialization (shapes from the module's __init__)
# ----------------------------------------------------------------------------
def init_params(key, n_inputs, n_outputs, kernel_size):
    keys = jax.random.split(key, 6)
    v1 = 0.01 * jax.random.normal(keys[0], (n_outputs, n_inputs, kernel_size), jnp.float32)
    v2 = 0.01 * jax.random.normal(keys[1], (n_outputs, n_outputs, kernel_size), jnp.float32)
    params = {
        "conv1_v": v1,
        "conv1_g": jnp.sqrt(jnp.sum(v1 * v1, axis=(1, 2))),   # weight_norm init: g=||v||
        "conv1_b": 0.01 * jax.random.normal(keys[2], (n_outputs,), jnp.float32),
        "conv2_v": v2,
        "conv2_g": jnp.sqrt(jnp.sum(v2 * v2, axis=(1, 2))),
        "conv2_b": 0.01 * jax.random.normal(keys[3], (n_outputs,), jnp.float32),
        "bn_gamma": jnp.ones((n_outputs,), jnp.float32),      # BatchNorm1d defaults
        "bn_beta": jnp.zeros((n_outputs,), jnp.float32),
    }
    if n_inputs != n_outputs:
        params["down_w"] = 0.01 * jax.random.normal(
            keys[4], (n_outputs, n_inputs, 1), jnp.float32)
        params["down_b"] = 0.01 * jax.random.normal(keys[5], (n_outputs,), jnp.float32)
    return params


if __name__ == "__main__":
    key = jax.random.PRNGKey(0)
    kx, kp = jax.random.split(key)

    # Small shapes consistent with the module: B=2, n_inputs=4, n_outputs=8,
    # kernel_size=3, dilation=1, L=16; pad=(1,0) aligns conv2 output with the
    # stride-2 downsample residual (both length 8).
    B, n_inputs, n_outputs, K, dilation, L = 2, 4, 8, 3, 1, 16
    x = jax.random.normal(kx, (B, n_inputs, L), jnp.float32)
    params = init_params(kp, n_inputs, n_outputs, K)
    pad = (1, 0)

    fwd = jax.jit(functools.partial(
        hr_temporal_block_forward, pad=pad, kernel_size=K, dilation=dilation))
    out = jax.block_until_ready(fwd(params, x))
    assert out.shape == (B, n_outputs, 8), out.shape
    assert bool(jnp.all(jnp.isfinite(out)))
    print("KERNEL_OK")
</pallas_src>

<mosaic_0001>
module attributes {stable_mosaic.version = 11 : i64} {
  func.func @_conv1_kernel(%arg0: i32, %arg1: i32, %arg2: memref<1x1x24x4xf32, #tpu.memory_space<vmem>>, %arg3: memref<3x4x128xf32, #tpu.memory_space<vmem>>, %arg4: memref<1x128xf32, #tpu.memory_space<vmem>>, %arg5: memref<1x8x128xbf16, #tpu.memory_space<vmem>>) attributes {dimension_semantics = [#tpu.dimension_semantics<parallel>, #tpu.dimension_semantics<parallel>], iteration_bounds = array<i64: 2, 1>, scalar_prefetch = 0 : i64, scratch_operands = 0 : i64, tpu.core_type = #tpu.core_type<tc>, window_params = [{transform_indices = @transform_0, window_bounds = array<i64: 1, 1, 24, 4>}, {pipeline_mode = #tpu.pipeline_mode<synchronous>, transform_indices = @transform_1, window_bounds = array<i64: 3, 4, 128>}, {pipeline_mode = #tpu.pipeline_mode<synchronous>, transform_indices = @transform_2, window_bounds = array<i64: 1, 128>}, {transform_indices = @transform_3, window_bounds = array<i64: 1, 8, 128>}]} {
    %c0 = arith.constant 0 : index
    %c0_0 = arith.constant 0 : index
    %c0_1 = arith.constant 0 : index
    %c0_2 = arith.constant 0 : index
    %0 = tpu.strided_load %arg2[%c0, %c0_0, %c0_1, %c0_2] {strides = array<i32: 1, 1, 2, 1>} : memref<1x1x24x4xf32, #tpu.memory_space<vmem>>, vector<1x1x8x4xf32>
    %1 = vector.shape_cast %0 : vector<1x1x8x4xf32> to vector<8x4xf32>
    %c0_3 = arith.constant 0 : index
    %c0_4 = arith.constant 0 : index
    %c0_5 = arith.constant 0 : index
    %2 = vector.load %arg3[%c0_3, %c0_4, %c0_5] : memref<3x4x128xf32, #tpu.memory_space<vmem>>, vector<1x4x128xf32>
    %3 = vector.shape_cast %2 : vector<1x4x128xf32> to vector<4x128xf32>
    %cst = arith.constant dense<0.000000e+00> : vector<8x128xf32>
    %4 = tpu.matmul %1, %3, %cst {dimension_numbers = #tpu.dot_dimension_numbers<[1], [0], [0], [1], [0, 0, 1, 1], [], []>} : vector<8x4xf32>, vector<4x128xf32>, vector<8x128xf32> -> vector<8x128xf32>
    %c0_6 = arith.constant 0 : index
    %c0_7 = arith.constant 0 : index
    %c1 = arith.constant 1 : index
    %c0_8 = arith.constant 0 : index
    %5 = tpu.strided_load %arg2[%c0_6, %c0_7, %c1, %c0_8] {strides = array<i32: 1, 1, 2, 1>} : memref<1x1x24x4xf32, #tpu.memory_space<vmem>>, vector<1x1x8x4xf32>
    %6 = vector.shape_cast %5 : vector<1x1x8x4xf32> to vector<8x4xf32>
    %c1_9 = arith.constant 1 : index
    %c0_10 = arith.constant 0 : index
    %c0_11 = arith.constant 0 : index
    %7 = vector.load %arg3[%c1_9, %c0_10, %c0_11] : memref<3x4x128xf32, #tpu.memory_space<vmem>>, vector<1x4x128xf32>
    %8 = vector.shape_cast %7 : vector<1x4x128xf32> to vector<4x128xf32>
    %cst_12 = arith.constant dense<0.000000e+00> : vector<8x128xf32>
    %9 = tpu.matmul %6, %8, %cst_12 {dimension_numbers = #tpu.dot_dimension_numbers<[1], [0], [0], [1], [0, 0, 1, 1], [], []>} : vector<8x4xf32>, vector<4x128xf32>, vector<8x128xf32> -> vector<8x128xf32>
    %10 = arith.addf %4, %9 : vector<8x128xf32>
    %c0_13 = arith.constant 0 : index
    %c0_14 = arith.constant 0 : index
    %c2 = arith.constant 2 : index
    %c0_15 = arith.constant 0 : index
    %11 = tpu.strided_load %arg2[%c0_13, %c0_14, %c2, %c0_15] {strides = array<i32: 1, 1, 2, 1>} : memref<1x1x24x4xf32, #tpu.memory_space<vmem>>, vector<1x1x8x4xf32>
    %12 = vector.shape_cast %11 : vector<1x1x8x4xf32> to vector<8x4xf32>
    %c2_16 = arith.constant 2 : index
    %c0_17 = arith.constant 0 : index
    %c0_18 = arith.constant 0 : index
    %13 = vector.load %arg3[%c2_16, %c0_17, %c0_18] : memref<3x4x128xf32, #tpu.memory_space<vmem>>, vector<1x4x128xf32>
    %14 = vector.shape_cast %13 : vector<1x4x128xf32> to vector<4x128xf32>
    %cst_19 = arith.constant dense<0.000000e+00> : vector<8x128xf32>
    %15 = tpu.matmul %12, %14, %cst_19 {dimension_numbers = #tpu.dot_dimension_numbers<[1], [0], [0], [1], [0, 0, 1, 1], [], []>} : vector<8x4xf32>, vector<4x128xf32>, vector<8x128xf32> -> vector<8x128xf32>
    %16 = arith.addf %10, %15 : vector<8x128xf32>
    %c0_20 = arith.constant 0 : index
    %c0_21 = arith.constant 0 : index
    %17 = vector.load %arg4[%c0_20, %c0_21] : memref<1x128xf32, #tpu.memory_space<vmem>>, vector<1x128xf32>
    %18 = vector.broadcast %17 : vector<1x128xf32> to vector<8x128xf32>
    %19 = arith.addf %16, %18 : vector<8x128xf32>
    %cst_22 = arith.constant 0.000000e+00 : f32
    %20 = vector.broadcast %cst_22 : f32 to vector<8x128xf32>
    %21 = arith.maximumf %19, %20 : vector<8x128xf32>
    %22 = arith.truncf %21 : vector<8x128xf32> to vector<8x128xbf16>
    %c0_23 = arith.constant 0 : index
    %c0_24 = arith.constant 0 : index
    %c0_25 = arith.constant 0 : index
    %23 = vector.load %arg5[%c0_23, %c0_24, %c0_25] : memref<1x8x128xbf16, #tpu.memory_space<vmem>>, vector<1x8x128xbf16>
    %24 = vector.shape_cast %23 : vector<1x8x128xbf16> to vector<8x128xbf16>
    %25 = vector.shape_cast %22 : vector<8x128xbf16> to vector<1x8x128xbf16>
    tpu.vector_store %arg5[%c0_23, %c0_24, %c0_25], %25 {strides = array<i32>} : memref<1x8x128xbf16, #tpu.memory_space<vmem>>, vector<1x8x128xbf16>,
    return
  }
  func.func @transform_0(%arg0: i32, %arg1: i32) -> (i32, i32, i32, i32) {
    %c0_i32 = arith.constant 0 : i32
    %c0_i32_0 = arith.constant 0 : i32
    %c0_i32_1 = arith.constant 0 : i32
    return %arg0, %arg1, %c0_i32, %c0_i32_0 : i32, i32, i32, i32
  }
  func.func @transform_1(%arg0: i32, %arg1: i32) -> (i32, i32, i32) {
    %c0_i32 = arith.constant 0 : i32
    %c0_i32_0 = arith.constant 0 : i32
    %c0_i32_1 = arith.constant 0 : i32
    %c0_i32_2 = arith.constant 0 : i32
    return %c0_i32, %c0_i32_0, %c0_i32_1 : i32, i32, i32
  }
  func.func @transform_2(%arg0: i32, %arg1: i32) -> (i32, i32) {
    %c0_i32 = arith.constant 0 : i32
    %c0_i32_0 = arith.constant 0 : i32
    %c0_i32_1 = arith.constant 0 : i32
    return %c0_i32, %c0_i32_0 : i32, i32
  }
  func.func @transform_3(%arg0: i32, %arg1: i32) -> (i32, i32, i32) {
    %c0_i32 = arith.constant 0 : i32
    %c0_i32_0 = arith.constant 0 : i32
    return %arg0, %arg1, %c0_i32 : i32, i32, i32
  }
}

module attributes {stable_mosaic.version = 11 : i64} {
  func.func @_conv2_kernel(%arg0: i32, %arg1: i32, %arg2: memref<1x1x16x128xbf16, #tpu.memory_space<vmem>>, %arg3: memref<3x128x128xbf16, #tpu.memory_space<vmem>>, %arg4: memref<1x128xf32, #tpu.memory_space<vmem>>, %arg5: memref<1x8x4xf32, #tpu.memory_space<vmem>>, %arg6: memref<4x128xf32, #tpu.memory_space<vmem>>, %arg7: memref<1x128xf32, #tpu.memory_space<vmem>>, %arg8: memref<1x8x128xbf16, #tpu.memory_space<vmem>>, %arg9: memref<1x1x128xf32, #tpu.memory_space<vmem>>, %arg10: memref<1x1x128xf32, #tpu.memory_space<vmem>>) attributes {dimension_semantics = [#tpu.dimension_semantics<parallel>, #tpu.dimension_semantics<arbitrary>], iteration_bounds = array<i64: 2, 1>, scalar_prefetch = 0 : i64, scratch_operands = 0 : i64, tpu.core_type = #tpu.core_type<tc>, window_params = [{transform_indices = @transform_0, window_bounds = array<i64: 1, 1, 16, 128>}, {pipeline_mode = #tpu.pipeline_mode<synchronous>, transform_indices = @transform_1, window_bounds = array<i64: 3, 128, 128>}, {pipeline_mode = #tpu.pipeline_mode<synchronous>, transform_indices = @transform_2, window_bounds = array<i64: 1, 128>}, {transform_indices = @transform_3, window_bounds = array<i64: 1, 8, 4>}, {pipeline_mode = #tpu.pipeline_mode<synchronous>, transform_indices = @transform_4, window_bounds = array<i64: 4, 128>}, {pipeline_mode = #tpu.pipeline_mode<synchronous>, transform_indices = @transform_5, window_bounds = array<i64: 1, 128>}, {transform_indices = @transform_6, window_bounds = array<i64: 1, 8, 128>}, {transform_indices = @transform_7, window_bounds = array<i64: 1, 1, 128>}, {transform_indices = @transform_8, window_bounds = array<i64: 1, 1, 128>}]} {
    %c0_i32 = arith.constant 0 : i32
    %0 = arith.cmpi eq, %arg1, %c0_i32 : i32
    %1 = arith.extui %0 : i1 to i32
    %c0_i32_0 = arith.constant 0 : i32
    %2 = arith.cmpi ne, %1, %c0_i32_0 : i32
    scf.if %2 {
      %cst_41 = arith.constant 0.000000e+00 : f32
      %53 = vector.broadcast %cst_41 : f32 to vector<1x128xf32>
      %c0_42 = arith.constant 0 : index
      %c0_43 = arith.constant 0 : index
      %c0_44 = arith.constant 0 : index
      %54 = vector.load %arg9[%c0_42, %c0_43, %c0_44] : memref<1x1x128xf32, #tpu.memory_space<vmem>>, vector<1x1x128xf32>
      %55 = vector.shape_cast %54 : vector<1x1x128xf32> to vector<1x128xf32>
      %56 = vector.shape_cast %53 : vector<1x128xf32> to vector<1x1x128xf32>
      tpu.vector_store %arg9[%c0_42, %c0_43, %c0_44], %56 {strides = array<i32>} : memref<1x1x128xf32, #tpu.memory_space<vmem>>, vector<1x1x128xf32>,
      %cst_45 = arith.constant 0.000000e+00 : f32
      %57 = vector.broadcast %cst_45 : f32 to vector<1x128xf32>
      %c0_46 = arith.constant 0 : index
      %c0_47 = arith.constant 0 : index
      %c0_48 = arith.constant 0 : index
      %58 = vector.load %arg10[%c0_46, %c0_47, %c0_48] : memref<1x1x128xf32, #tpu.memory_space<vmem>>, vector<1x1x128xf32>
      %59 = vector.shape_cast %58 : vector<1x1x128xf32> to vector<1x128xf32>
      %60 = vector.shape_cast %57 : vector<1x128xf32> to vector<1x1x128xf32>
      tpu.vector_store %arg10[%c0_46, %c0_47, %c0_48], %60 {strides = array<i32>} : memref<1x1x128xf32, #tpu.memory_space<vmem>>, vector<1x1x128xf32>,
    } else {
    }
    %c0 = arith.constant 0 : index
    %c0_1 = arith.constant 0 : index
    %c0_2 = arith.constant 0 : index
    %c0_3 = arith.constant 0 : index
    %3 = vector.load %arg2[%c0, %c0_1, %c0_2, %c0_3] : memref<1x1x16x128xbf16, #tpu.memory_space<vmem>>, vector<1x1x16x128xbf16>
    %4 = vector.shape_cast %3 : vector<1x1x16x128xbf16> to vector<16x128xbf16>
    %5 = vector.extract_strided_slice %4 {offsets = [0, 0], sizes = [8, 128], strides = [1, 1]} : vector<16x128xbf16> to vector<8x128xbf16>
    %c0_4 = arith.constant 0 : index
    %c0_5 = arith.constant 0 : index
    %c0_6 = arith.constant 0 : index
    %6 = vector.load %arg3[%c0_4, %c0_5, %c0_6] : memref<3x128x128xbf16, #tpu.memory_space<vmem>>, vector<1x128x128xbf16>
    %7 = vector.shape_cast %6 : vector<1x128x128xbf16> to vector<128x128xbf16>
    %cst = arith.constant dense<0.000000e+00> : vector<8x128xf32>
    %8 = tpu.matmul %5, %7, %cst {dimension_numbers = #tpu.dot_dimension_numbers<[1], [0], [0], [1], [0, 0, 1, 1], [], []>} : vector<8x128xbf16>, vector<128x128xbf16>, vector<8x128xf32> -> vector<8x128xf32>
    %9 = vector.extract_strided_slice %4 {offsets = [1, 0], sizes = [8, 128], strides = [1, 1]} : vector<16x128xbf16> to vector<8x128xbf16>
    %c1 = arith.constant 1 : index
    %c0_7 = arith.constant 0 : index
    %c0_8 = arith.constant 0 : index
    %10 = vector.load %arg3[%c1, %c0_7, %c0_8] : memref<3x128x128xbf16, #tpu.memory_space<vmem>>, vector<1x128x128xbf16>
    %11 = vector.shape_cast %10 : vector<1x128x128xbf16> to vector<128x128xbf16>
    %cst_9 = arith.constant dense<0.000000e+00> : vector<8x128xf32>
    %12 = tpu.matmul %9, %11, %cst_9 {dimension_numbers = #tpu.dot_dimension_numbers<[1], [0], [0], [1], [0, 0, 1, 1], [], []>} : vector<8x128xbf16>, vector<128x128xbf16>, vector<8x128xf32> -> vector<8x128xf32>
    %13 = arith.addf %8, %12 : vector<8x128xf32>
    %14 = vector.extract_strided_slice %4 {offsets = [2, 0], sizes = [8, 128], strides = [1, 1]} : vector<16x128xbf16> to vector<8x128xbf16>
    %c2 = arith.constant 2 : index
    %c0_10 = arith.constant 0 : index
    %c0_11 = arith.constant 0 : index
    %15 = vector.load %arg3[%c2, %c0_10, %c0_11] : memref<3x128x128xbf16, #tpu.memory_space<vmem>>, vector<1x128x128xbf16>
    %16 = vector.shape_cast %15 : vector<1x128x128xbf16> to vector<128x128xbf16>
    %cst_12 = arith.constant dense<0.000000e+00> : vector<8x128xf32>
    %17 = tpu.matmul %14, %16, %cst_12 {dimension_numbers = #tpu.dot_dimension_numbers<[1], [0], [0], [1], [0, 0, 1, 1], [], []>} : vector<8x128xbf16>, vector<128x128xbf16>, vector<8x128xf32> -> vector<8x128xf32>
    %18 = arith.addf %13, %17 : vector<8x128xf32>
    %c0_13 = arith.constant 0 : index
    %c0_14 = arith.constant 0 : index
    %19 = vector.load %arg4[%c0_13, %c0_14] : memref<1x128xf32, #tpu.memory_space<vmem>>, vector<1x128xf32>
    %20 = vector.broadcast %19 : vector<1x128xf32> to vector<8x128xf32>
    %21 = arith.addf %18, %20 : vector<8x128xf32>
    %cst_15 = arith.constant 0.000000e+00 : f32
    %22 = vector.broadcast %cst_15 : f32 to vector<8x128xf32>
    %23 = arith.maximumf %21, %22 : vector<8x128xf32>
    %c0_16 = arith.constant 0 : index
    %c0_17 = arith.constant 0 : index
    %c0_18 = arith.constant 0 : index
    %24 = vector.load %arg5[%c0_16, %c0_17, %c0_18] : memref<1x8x4xf32, #tpu.memory_space<vmem>>, vector<1x8x4xf32>
    %25 = vector.shape_cast %24 : vector<1x8x4xf32> to vector<8x4xf32>
    %c0_19 = arith.constant 0 : index
    %c0_20 = arith.constant 0 : index
    %26 = vector.load %arg6[%c0_19, %c0_20] : memref<4x128xf32, #tpu.memory_space<vmem>>, vector<4x128xf32>
    %cst_21 = arith.constant dense<0.000000e+00> : vector<8x128xf32>
    %27 = tpu.matmul %25, %26, %cst_21 {dimension_numbers = #tpu.dot_dimension_numbers<[1], [0], [0], [1], [0, 0, 1, 1], [], []>} : vector<8x4xf32>, vector<4x128xf32>, vector<8x128xf32> -> vector<8x128xf32>
    %c0_22 = arith.constant 0 : index
    %c0_23 = arith.constant 0 : index
    %28 = vector.load %arg7[%c0_22, %c0_23] : memref<1x128xf32, #tpu.memory_space<vmem>>, vector<1x128xf32>
    %29 = vector.broadcast %28 : vector<1x128xf32> to vector<8x128xf32>
    %30 = arith.addf %27, %29 : vector<8x128xf32>
    %31 = arith.addf %23, %30 : vector<8x128xf32>
    %32 = arith.truncf %31 : vector<8x128xf32> to vector<8x128xbf16>
    %c0_24 = arith.constant 0 : index
    %c0_25 = arith.constant 0 : index
    %c0_26 = arith.constant 0 : index
    %33 = vector.load %arg8[%c0_24, %c0_25, %c0_26] : memref<1x8x128xbf16, #tpu.memory_space<vmem>>, vector<1x8x128xbf16>
    %34 = vector.shape_cast %33 : vector<1x8x128xbf16> to vector<8x128xbf16>
    %35 = vector.shape_cast %32 : vector<8x128xbf16> to vector<1x8x128xbf16>
    tpu.vector_store %arg8[%c0_24, %c0_25, %c0_26], %35 {strides = array<i32>} : memref<1x8x128xbf16, #tpu.memory_space<vmem>>, vector<1x8x128xbf16>,
    %c0_27 = arith.constant 0 : index
    %c0_28 = arith.constant 0 : index
    %c0_29 = arith.constant 0 : index
    %36 = vector.load %arg9[%c0_27, %c0_28, %c0_29] : memref<1x1x128xf32, #tpu.memory_space<vmem>>, vector<1x1x128xf32>
    %37 = vector.shape_cast %36 : vector<1x1x128xf32> to vector<1x128xf32>
    %cst_30 = arith.constant dense<0.000000e+00> : vector<128xf32>
    %38 = vector.multi_reduction <add>, %31, %cst_30 [0] : vector<8x128xf32> to vector<128xf32>
    %39 = vector.shape_cast %38 : vector<128xf32> to vector<1x128xf32>
    %40 = arith.addf %37, %39 : vector<1x128xf32>
    %c0_31 = arith.constant 0 : index
    %c0_32 = arith.constant 0 : index
    %c0_33 = arith.constant 0 : index
    %41 = vector.load %arg9[%c0_31, %c0_32, %c0_33] : memref<1x1x128xf32, #tpu.memory_space<vmem>>, vector<1x1x128xf32>
    %42 = vector.shape_cast %41 : vector<1x1x128xf32> to vector<1x128xf32>
    %43 = vector.shape_cast %40 : vector<1x128xf32> to vector<1x1x128xf32>
    tpu.vector_store %arg9[%c0_31, %c0_32, %c0_33], %43 {strides = array<i32>} : memref<1x1x128xf32, #tpu.memory_space<vmem>>, vector<1x1x128xf32>,
    %c0_34 = arith.constant 0 : index
    %c0_35 = arith.constant 0 : index
    %c0_36 = arith.constant 0 : index
    %44 = vector.load %arg10[%c0_34, %c0_35, %c0_36] : memref<1x1x128xf32, #tpu.memory_space<vmem>>, vector<1x1x128xf32>
    %45 = vector.shape_cast %44 : vector<1x1x128xf32> to vector<1x128xf32>
    %46 = arith.mulf %31, %31 : vector<8x128xf32>
    %cst_37 = arith.constant dense<0.000000e+00> : vector<128xf32>
    %47 = vector.multi_reduction <add>, %46, %cst_37 [0] : vector<8x128xf32> to vector<128xf32>
    %48 = vector.shape_cast %47 : vector<128xf32> to vector<1x128xf32>
    %49 = arith.addf %45, %48 : vector<1x128xf32>
    %c0_38 = arith.constant 0 : index
    %c0_39 = arith.constant 0 : index
    %c0_40 = arith.constant 0 : index
    %50 = vector.load %arg10[%c0_38, %c0_39, %c0_40] : memref<1x1x128xf32, #tpu.memory_space<vmem>>, vector<1x1x128xf32>
    %51 = vector.shape_cast %50 : vector<1x1x128xf32> to vector<1x128xf32>
    %52 = vector.shape_cast %49 : vector<1x128xf32> to vector<1x1x128xf32>
    tpu.vector_store %arg10[%c0_38, %c0_39, %c0_40], %52 {strides = array<i32>} : memref<1x1x128xf32, #tpu.memory_space<vmem>>, vector<1x1x128xf32>,
    return
  }
  func.func @transform_0(%arg0: i32, %arg1: i32) -> (i32, i32, i32, i32) {
    %c0_i32 = arith.constant 0 : i32
    %c0_i32_0 = arith.constant 0 : i32
    %c0_i32_1 = arith.constant 0 : i32
    return %arg0, %arg1, %c0_i32, %c0_i32_0 : i32, i32, i32, i32
  }
  func.func @transform_1(%arg0: i32, %arg1: i32) -> (i32, i32, i32) {
    %c0_i32 = arith.constant 0 : i32
    %c0_i32_0 = arith.constant 0 : i32
    %c0_i32_1 = arith.constant 0 : i32
    %c0_i32_2 = arith.constant 0 : i32
    return %c0_i32, %c0_i32_0, %c0_i32_1 : i32, i32, i32
  }
  func.func @transform_2(%arg0: i32, %arg1: i32) -> (i32, i32) {
    %c0_i32 = arith.constant 0 : i32
    %c0_i32_0 = arith.constant 0 : i32
    %c0_i32_1 = arith.constant 0 : i32
    return %c0_i32, %c0_i32_0 : i32, i32
  }
  func.func @transform_3(%arg0: i32, %arg1: i32) -> (i32, i32, i32) {
    %c0_i32 = arith.constant 0 : i32
    %c0_i32_0 = arith.constant 0 : i32
    return %arg0, %arg1, %c0_i32 : i32, i32, i32
  }
  func.func @transform_4(%arg0: i32, %arg1: i32) -> (i32, i32) {
    %c0_i32 = arith.constant 0 : i32
    %c0_i32_0 = arith.constant 0 : i32
    %c0_i32_1 = arith.constant 0 : i32
    return %c0_i32, %c0_i32_0 : i32, i32
  }
  func.func @transform_5(%arg0: i32, %arg1: i32) -> (i32, i32) {
    %c0_i32 = arith.constant 0 : i32
    %c0_i32_0 = arith.constant 0 : i32
    %c0_i32_1 = arith.constant 0 : i32
    return %c0_i32, %c0_i32_0 : i32, i32
  }
  func.func @transform_6(%arg0: i32, %arg1: i32) -> (i32, i32, i32) {
    %c0_i32 = arith.constant 0 : i32
    %c0_i32_0 = arith.constant 0 : i32
    return %arg0, %arg1, %c0_i32 : i32, i32, i32
  }
  func.func @transform_7(%arg0: i32, %arg1: i32) -> (i32, i32, i32) {
    %c0_i32 = arith.constant 0 : i32
    %c0_i32_0 = arith.constant 0 : i32
    %c0_i32_1 = arith.constant 0 : i32
    return %arg0, %c0_i32, %c0_i32_0 : i32, i32, i32
  }
  func.func @transform_8(%arg0: i32, %arg1: i32) -> (i32, i32, i32) {
    %c0_i32 = arith.constant 0 : i32
    %c0_i32_0 = arith.constant 0 : i32
    %c0_i32_1 = arith.constant 0 : i32
    return %arg0, %c0_i32, %c0_i32_0 : i32, i32, i32
  }
}

module attributes {stable_mosaic.version = 11 : i64} {
  func.func @_bn_relu_kernel(%arg0: i32, %arg1: i32, %arg2: memref<1x8x128xbf16, #tpu.memory_space<vmem>>, %arg3: memref<1x128xf32, #tpu.memory_space<vmem>>, %arg4: memref<1x128xf32, #tpu.memory_space<vmem>>, %arg5: memref<1x8x8xf32, #tpu.memory_space<vmem>>) attributes {dimension_semantics = [#tpu.dimension_semantics<parallel>, #tpu.dimension_semantics<parallel>], iteration_bounds = array<i64: 2, 1>, scalar_prefetch = 0 : i64, scratch_operands = 0 : i64, tpu.core_type = #tpu.core_type<tc>, window_params = [{transform_indices = @transform_0, window_bounds = array<i64: 1, 8, 128>}, {pipeline_mode = #tpu.pipeline_mode<synchronous>, transform_indices = @transform_1, window_bounds = array<i64: 1, 128>}, {pipeline_mode = #tpu.pipeline_mode<synchronous>, transform_indices = @transform_2, window_bounds = array<i64: 1, 128>}, {transform_indices = @transform_3, window_bounds = array<i64: 1, 8, 8>}]} {
    %c0 = arith.constant 0 : index
    %c0_0 = arith.constant 0 : index
    %c0_1 = arith.constant 0 : index
    %0 = vector.load %arg2[%c0, %c0_0, %c0_1] : memref<1x8x128xbf16, #tpu.memory_space<vmem>>, vector<1x8x128xbf16>
    %1 = vector.shape_cast %0 : vector<1x8x128xbf16> to vector<8x128xbf16>
    %2 = arith.extf %1 : vector<8x128xbf16> to vector<8x128xf32>
    %c0_2 = arith.constant 0 : index
    %c0_3 = arith.constant 0 : index
    %3 = vector.load %arg3[%c0_2, %c0_3] : memref<1x128xf32, #tpu.memory_space<vmem>>, vector<1x128xf32>
    %4 = vector.broadcast %3 : vector<1x128xf32> to vector<8x128xf32>
    %5 = arith.mulf %2, %4 : vector<8x128xf32>
    %c0_4 = arith.constant 0 : index
    %c0_5 = arith.constant 0 : index
    %6 = vector.load %arg4[%c0_4, %c0_5] : memref<1x128xf32, #tpu.memory_space<vmem>>, vector<1x128xf32>
    %7 = vector.broadcast %6 : vector<1x128xf32> to vector<8x128xf32>
    %8 = arith.addf %5, %7 : vector<8x128xf32>
    %cst = arith.constant 0.000000e+00 : f32
    %9 = vector.broadcast %cst : f32 to vector<8x128xf32>
    %10 = arith.maximumf %8, %9 : vector<8x128xf32>
    %11 = tpu.transpose %10, [1, 0] : vector<8x128xf32> -> vector<128x8xf32>
    %12 = vector.extract_strided_slice %11 {offsets = [0, 0], sizes = [8, 8], strides = [1, 1]} : vector<128x8xf32> to vector<8x8xf32>
    %c0_6 = arith.constant 0 : index
    %c0_7 = arith.constant 0 : index
    %c0_8 = arith.constant 0 : index
    %13 = vector.load %arg5[%c0_6, %c0_7, %c0_8] : memref<1x8x8xf32, #tpu.memory_space<vmem>>, vector<1x8x8xf32>
    %14 = vector.shape_cast %13 : vector<1x8x8xf32> to vector<8x8xf32>
    %15 = vector.shape_cast %12 : vector<8x8xf32> to vector<1x8x8xf32>
    tpu.vector_store %arg5[%c0_6, %c0_7, %c0_8], %15 {strides = array<i32>} : memref<1x8x8xf32, #tpu.memory_space<vmem>>, vector<1x8x8xf32>,
    return
  }
  func.func @transform_0(%arg0: i32, %arg1: i32) -> (i32, i32, i32) {
    %c0_i32 = arith.constant 0 : i32
    %c0_i32_0 = arith.constant 0 : i32
    return %arg0, %arg1, %c0_i32 : i32, i32, i32
  }
  func.func @transform_1(%arg0: i32, %arg1: i32) -> (i32, i32) {
    %c0_i32 = arith.constant 0 : i32
    %c0_i32_0 = arith.constant 0 : i32
    %c0_i32_1 = arith.constant 0 : i32
    return %c0_i32, %c0_i32_0 : i32, i32
  }
  func.func @transform_2(%arg0: i32, %arg1: i32) -> (i32, i32) {
    %c0_i32 = arith.constant 0 : i32
    %c0_i32_0 = arith.constant 0 : i32
    %c0_i32_1 = arith.constant 0 : i32
    return %c0_i32, %c0_i32_0 : i32, i32
  }
  func.func @transform_3(%arg0: i32, %arg1: i32) -> (i32, i32, i32) {
    %c0_i32 = arith.constant 0 : i32
    %c0_i32_0 = arith.constant 0 : i32
    return %arg0, %c0_i32, %arg1 : i32, i32, i32
  }
}

</mosaic_0001>

<llo_original>
// kernel: hr_temporal_block_forward.5
$region0: #{hr_temporal_block_forward.5}
  #allocation0 [shape = 'u32[]', space=smem, size = 0x4, offset = 0x4, fixed_abs, tag = 'smem constant byte address 0x4 - core index']
  #allocation1 [shape = 'u32[72,128]{1,0:T(1,128)}', space=vmem, size = 0x9000, scoped, tag = 'internal scratch']
  %s0 = inlined_call_operand.vmem [shape: bf16[2,8,128], index: 0, kind: input, shape index: {}]
  %s1 = inlined_call_operand.vmem [shape: f32[1,128], index: 1, kind: input, shape index: {}]
  %s2 = inlined_call_operand.vmem [shape: f32[1,128], index: 2, kind: input, shape index: {}]
  %s3 = inlined_call_operand.hbm [shape: f32[2,8,8], index: 3, kind: output, shape index: {}]
  %s4 = sld [smem:[#allocation0]]
  $region45: #{hr_temporal_block_forward.5} parent=0
    _
  %s6 = ssub.s32 1, %s4
  %s7 = scalar_select 0, %s6, %s4
  $region1: #{hr_temporal_block_forward.5} parent=0
    #allocation2 [shape = 'u8[8192]{0}', space=vmem, size = 0x2000, scoped, tag = 'output window, operand 0']
    #allocation3 [shape = 's32[2]{0}', space=sflag, size = 0x8, scoped, tag = 'scoped memory for hr_temporal_block_forward.5']
    %8 = vsyncpa [#allocation3], 0
    %s9 = scalar_lea.sflag [#allocation3], 1
    %10 = vsyncpa %s9, 0
    loop: start=0, step=1, limit=4
    $region2: #{hr_temporal_block_forward.5} parent=1 // loop_pre_header
      _
    $region3: #{hr_temporal_block_forward.5} parent=1 // loop_header
      %s12 = sphi 0, %s16
      %p13 = scmp.ge.s32.totalorder %s12, 4
      %s19 = sphi 0, %s31
      %s20 = sphi 0, %s27
      %s21 = sphi 0, %s19
      %s22 = sphi 0, %s20
      %s23 = sphi 0, %s21
      %s24 = sphi 0, %s22
      %s36 = sphi 0, %s38
      %s39 = sphi 0, %s36
      %s40 = sphi 0, %s39
      %s56 = sphi 0, %s40
      %s60 = sphi 0, %s60
      %s62 = sphi 0, %s60
      %s63 = sphi 0, %s62
      %s77 = sphi 0, %s63
      %s81 = sphi 0, %s81
      %s83 = sphi 0, %s81
      %s84 = sphi 0, %s83
      %s98 = sphi 0, %s84
      %s106 = sphi 0, %s108
      %s109 = sphi 0, %s106
      %s110 = sphi 0, %s109
      %s126 = sphi 0, %s110
    $region4: #{hr_temporal_block_forward.5} parent=1 // loop_header_branch
      %15 = sbr.rel (%p13) target = $region8
    $region5: #{hr_temporal_block_forward.5} parent=1 // loop_body
      %s17 = ssub.s32 %s12, 1
      %s18 = ssub.s32 %s12, 2
      %s25 = sadd.s32 1, %s20
      %p26 = scmp.ge.s32.totalorder %s25, 1
      %s27 = scalar_select %p26, 0, %s25
      %s28 = sadd.s32 1, %s19
      %s29 = scalar_select %p26, %s28, %s19
      %p30 = scmp.ge.s32.totalorder %s29, 2
      %s31 = scalar_select %p30, 0, %s29
      %s32 = ssub.s32 %s19, %s31
      %s33 = ssub.s32 %s20, %s27
      %s34 = sor.u32 %s32, %s33
      %p35 = scmp.eq.s32.totalorder %s34, 0
      %s37 = sadd.s32 %s36, 1
      %s38 = scalar_select %p35, %s36, %s37
      %p41 = pneg %p35
      %p42 = scmp.eq.s32.totalorder %s12, 1
      %p43 = por %p41, %p42
      %p44 = scmp.ne.s32.totalorder %s36, %s39
      %p45 = scmp.eq.s32.totalorder %s12, 0
      %p46 = por %p44, %p45
      %p47 = scmp.ne.s32.totalorder %s36, %s39
      %p48 = scmp.eq.s32.totalorder %s17, 1
      %p49 = por %p47, %p48
      %p50 = scmp.ne.s32.totalorder %s39, %s40
      %p51 = scmp.eq.s32.totalorder %s17, 0
      %p52 = por %p50, %p51
      %p53 = scmp.ne.s32.totalorder %s39, %s40
      %p54 = scmp.eq.s32.totalorder %s18, 1
      %p55 = por %p53, %p54
      %p57 = scmp.ne.s32.totalorder %s40, %s56
      %p58 = scmp.eq.s32.totalorder %s18, 0
      %p59 = por %p57, %p58
      %s61 = sadd.s32 %s60, 1
      %p64 = scmp.eq.s32.totalorder %s12, 1
      %p65 = scmp.ne.s32.totalorder %s60, %s62
      %p66 = scmp.eq.s32.totalorder %s12, 0
      %p67 = por %p65, %p66
      %p68 = scmp.ne.s32.totalorder %s60, %s62
      %p69 = scmp.eq.s32.totalorder %s17, 1
      %p70 = por %p68, %p69
      %p71 = scmp.ne.s32.totalorder %s62, %s63
      %p72 = scmp.eq.s32.totalorder %s17, 0
      %p73 = por %p71, %p72
      %p74 = scmp.ne.s32.totalorder %s62, %s63
      %p75 = scmp.eq.s32.totalorder %s18, 1
      %p76 = por %p74, %p75
      %p78 = scmp.ne.s32.totalorder %s63, %s77
      %p79 = scmp.eq.s32.totalorder %s18, 0
      %p80 = por %p78, %p79
      %s82 = sadd.s32 %s81, 1
      %p85 = scmp.eq.s32.totalorder %s12, 1
      %p86 = scmp.ne.s32.totalorder %s81, %s83
      %p87 = scmp.eq.s32.totalorder %s12, 0
      %p88 = por %p86, %p87
      %p89 = scmp.ne.s32.totalorder %s81, %s83
      %p90 = scmp.eq.s32.totalorder %s17, 1
      %p91 = por %p89, %p90
      %p92 = scmp.ne.s32.totalorder %s83, %s84
      %p93 = scmp.eq.s32.totalorder %s17, 0
      %p94 = por %p92, %p93
      %p95 = scmp.ne.s32.totalorder %s83, %s84
      %p96 = scmp.eq.s32.totalorder %s18, 1
      %p97 = por %p95, %p96
      %p99 = scmp.ne.s32.totalorder %s84, %s98
      %p100 = scmp.eq.s32.totalorder %s18, 0
      %p101 = por %p99, %p100
      %s102 = ssub.s32 %s19, %s31
      %s103 = ssub.s32 %s20, %s27
      %s104 = sor.u32 %s102, %s103
      %p105 = scmp.eq.s32.totalorder %s104, 0
      %s107 = sadd.s32 %s106, 1
      %s108 = scalar_select %p105, %s106, %s107
      %p111 = pneg %p105
      %p112 = scmp.eq.s32.totalorder %s12, 1
      %p113 = por %p111, %p112
      %p114 = scmp.ne.s32.totalorder %s106, %s109
      %p115 = scmp.eq.s32.totalorder %s12, 0
      %p116 = por %p114, %p115
      %p117 = scmp.ne.s32.totalorder %s106, %s109
      %p118 = scmp.eq.s32.totalorder %s17, 1
      %p119 = por %p117, %p118
      %p120 = scmp.ne.s32.totalorder %s109, %s110
      %p121 = scmp.eq.s32.totalorder %s17, 0
      %p122 = por %p120, %p121
      %p123 = scmp.ne.s32.totalorder %s109, %s110
      %p124 = scmp.eq.s32.totalorder %s18, 1
      %p125 = por %p123, %p124
      %p127 = scmp.ne.s32.totalorder %s110, %s126
      %p128 = scmp.eq.s32.totalorder %s18, 0
      %p129 = por %p127, %p128
      %p130 = scmp.le.s32.totalorder 1, %s12
      %p131 = scmp.lt.s32.totalorder %s12, 3
      %p132 = pnand %p130, %p131
      %p133 = pneg %p132
      // Predicated region
      $region9: #{hr_temporal_block_forward.5} parent=5 // pred_check
        _
      $region10: #{hr_temporal_block_forward.5} parent=5 // pred_check_branch
        %135 = sbr.rel (%p132) target = $region12
      $region11: #{hr_temporal_block_forward.5} parent=5 // pred_region
        %s136 = ssub.s32 %s12, 1
        // Predicated region
        $region13: #{hr_temporal_block_forward.5} parent=11 // pred_check
          %p137 = pneg %p73
        $region14: #{hr_temporal_block_forward.5} parent=11 // pred_check_branch
          %139 = sbr.rel (%p137) target = $region16
        $region15: #{hr_temporal_block_forward.5} parent=11 // pred_region
          _
        $region16: #{hr_temporal_block_forward.5} parent=11 // pred_fallthru
          _
        // Predicated region
        $region17: #{hr_temporal_block_forward.5} parent=11 // pred_check
          %p140 = pneg %p94
        $region18: #{hr_temporal_block_forward.5} parent=11 // pred_check_branch
          %142 = sbr.rel (%p140) target = $region20
        $region19: #{hr_temporal_block_forward.5} parent=11 // pred_region
          _
        $region20: #{hr_temporal_block_forward.5} parent=11 // pred_fallthru
          _
      $region12: #{hr_temporal_block_forward.5} parent=5 // pred_fallthru
        _
      %p143 = scmp.lt.s32.totalorder %s12, 2
      // Predicated region
      $region21: #{hr_temporal_block_forward.5} parent=5 // pred_check
        %p144 = pneg %p143
      $region22: #{hr_temporal_block_forward.5} parent=5 // pred_check_branch
        %146 = sbr.rel (%p144) target = $region24
      $region23: #{hr_temporal_block_forward.5} parent=5 // pred_region
        // Predicated region
        $region25: #{hr_temporal_block_forward.5} parent=23 // pred_check
          %p147 = pneg %p46
        $region26: #{hr_temporal_block_forward.5} parent=23 // pred_check_branch
          %149 = sbr.rel (%p147) target = $region28
        $region27: #{hr_temporal_block_forward.5} parent=23 // pred_region
          %p150 = scmp.lt.s32.totalorder %s19, 1
          %s151 = scalar_select %p150, %s19, 1
          %p152 = scmp.lt.s32.totalorder %s20, 0
          %s153 = scalar_select %p152, %s20, 0
          %s154 = sadd.s32 %s153, %s151
          %s155 = smul.addr %s154, 4
          %s156 = scalar_lea.vmem %s0, %s155
        $region28: #{hr_temporal_block_forward.5} parent=23 // pred_fallthru
          _
      $region24: #{hr_temporal_block_forward.5} parent=5 // pred_fallthru
        _
      %p157 = scmp.le.s32.totalorder 1, %s12
      %p158 = scmp.lt.s32.totalorder %s12, 3
      %p159 = pnand %p157, %p158
      %p160 = pneg %p159
      // Predicated region
      $region29: #{hr_temporal_block_forward.5} parent=5 // pred_check
        _
      $region30: #{hr_temporal_block_forward.5} parent=5 // pred_check_branch
        %162 = sbr.rel (%p159) target = $region32
      $region31: #{hr_temporal_block_forward.5} parent=5 // pred_region
        %s163 = ssub.s32 %s12, 1
        %p164 = scmp.lt.s32.totalorder %s21, 1
        %s165 = scalar_select %p164, %s21, 1
        %p166 = scmp.lt.s32.totalorder %s22, 0
        %s167 = scalar_select %p166, %s22, 0
        %s168 = sadd.s32 %s167, %s165
        %s169 = smul.addr %s168, 4
        %s170 = scalar_lea.vmem %s0, %s169
        %p171 = pneg %p52
        %p172 = pneg %p49
        %p173 = pneg %p73
        %p174 = pneg %p70
        %p175 = pneg %p94
        %p176 = pneg %p91
        %p177 = pneg %p122
        %p178 = pneg %p119
        %s179 = sand.u32 %s109, 1
        %s180 = scalar_lea.sflag [#allocation3], %s179
        %s181 = sand.u32 %s109, 1
        %s182 = smul.addr %s181, 8
        %s183 = scalar_lea.vmem [#allocation2], %s182
        %p184 = scmp.lt.s32.totalorder %s21, 1
        %s185 = scalar_select %p184, %s21, 1
        %p186 = scmp.lt.s32.totalorder %s22, 0
        %s187 = scalar_select %p186, %s22, 0
        %s188 = sadd.s32 %s187, %s185
        %s189 = smul.addr %s188, 4
        %s190 = scalar_lea.vmem %s0, %s189
        %v191 = vld [vmem:[%s190] sm:$0xf]
        %v192 = vunpack.c.l.bf16 %v191
        %v193 = vld [vmem:[%s1] sm:$0x1]
        %v195 = vperm.slane %v193, 0
        %v197 = vmul.f32 %v192, %v195
        %v198 = vld [vmem:[%s2] sm:$0x1]
        %v200 = vperm.slane %v198, 0
        %v202 = vadd.f32 %v197, %v200
        %v203 = vmax.f32 %v202, 0.0
        %204 = vxpose.xlu0.b32.start [1/16] %v203, 128
        %205 = vxpose.xlu0.b32.cont [2/16] 0.0, 128
        %206 = vxpose.xlu0.b32.cont [3/16] 0.0, 128
        %207 = vxpose.xlu0.b32.cont [4/16] 0.0, 128
        %208 = vxpose.xlu0.b32.cont [5/16] 0.0, 128
        %209 = vxpose.xlu0.b32.cont [6/16] 0.0, 128
        %210 = vxpose.xlu0.b32.cont [7/16] 0.0, 128
        %211 = vxpose.xlu0.b32.cont [8/16] 0.0, 128
        %212 = vxpose.xlu0.b32.cont [9/16] 0.0, 128
        %213 = vxpose.xlu0.b32.cont [10/16] 0.0, 128
        %214 = vxpose.xlu0.b32.cont [11/16] 0.0, 128
        %215 = vxpose.xlu0.b32.cont [12/16] 0.0, 128
        %216 = vxpose.xlu0.b32.cont [13/16] 0.0, 128
        %217 = vxpose.xlu0.b32.cont [14/16] 0.0, 128
        %218 = vxpose.xlu0.b32.cont [15/16] 0.0, 128
        %219 = vxpose.xlu0.b32.end [16/16] 0.0, 128
        %v220 = vpop.trf.xlu0
        %v221 = vpop.trf.xlu0
        %v222 = vpop.trf.xlu0
        %v223 = vpop.trf.xlu0
        %v224 = vpop.trf.xlu0
        %v225 = vpop.trf.xlu0
        %v226 = vpop.trf.xlu0
        %v227 = vpop.trf.xlu0
        %v228 = vpop.trf.xlu0
        %v229 = vpop.trf.xlu0
        %v230 = vpop.trf.xlu0
        %v231 = vpop.trf.xlu0
        %v232 = vpop.trf.xlu0
        %v233 = vpop.trf.xlu0
        %v234 = vpop.trf.xlu0
        %v235 = vpop.trf.xlu0
        %vm236 = vcmask 64512
        %237 = vst.msk [vmem:[%s183] sm:$0xff] %vm236, %v220
        %s238 = sand.u32 %s109, 1
        %s239 = scalar_lea.sflag [#allocation3], %s238
        %s240 = sand.u32 %s109, 1
        %s241 = smul.addr %s240, 8
        %s242 = scalar_lea.vmem [#allocation2], %s241
        // Predicated region
        $region33: #{hr_temporal_block_forward.5} parent=31 // pred_check
          %p243 = pneg %p119
        $region34: #{hr_temporal_block_forward.5} parent=31 // pred_check_branch
          %245 = sbr.rel (%p243) target = $region36
        $region35: #{hr_temporal_block_forward.5} parent=31 // pred_region
          %247 = vsyncadd %s239, 0
          %s248 = sadd.s32 %s22, %s21
          %s249 = smul.addr %s248, 8
          %s250 = scalar_lea.hbm %s3, %s249
          %s252 = sshll.u32 %s242, 4
          %s253 = int_to_ptr.vmem [resolvable:$true] %s252
          %s254 = sshll.u32 %s250, 4
          %s255 = int_to_ptr.hbm [resolvable:$true] %s254
          %257 = dma.vmem_to_hbm [thread:$0]  %s253, 128, %s255, %s239
        $region36: #{hr_temporal_block_forward.5} parent=31 // pred_fallthru
          _
      $region32: #{hr_temporal_block_forward.5} parent=5 // pred_fallthru
        _
      %p258 = scmp.le.s32.totalorder 2, %s12
      // Predicated region
      $region37: #{hr_temporal_block_forward.5} parent=5 // pred_check
        %p259 = pneg %p258
      $region38: #{hr_temporal_block_forward.5} parent=5 // pred_check_branch
        %261 = sbr.rel (%p259) target = $region40
      $region39: #{hr_temporal_block_forward.5} parent=5 // pred_region
        %s262 = ssub.s32 %s12, 2
        // Predicated region
        $region41: #{hr_temporal_block_forward.5} parent=39 // pred_check
          %p263 = pneg %p125
        $region42: #{hr_temporal_block_forward.5} parent=39 // pred_check_branch
          %265 = sbr.rel (%p263) target = $region44
        $region43: #{hr_temporal_block_forward.5} parent=39 // pred_region
          %s266 = sand.u32 %s110, 1
          %s267 = scalar_lea.sflag [#allocation3], %s266
          %s268 = sand.u32 %s110, 1
          %s269 = smul.addr %s268, 8
          %s270 = scalar_lea.vmem [#allocation2], %s269
          %272 = dma.done %s267, 128
        $region44: #{hr_temporal_block_forward.5} parent=39 // pred_fallthru
          _
      $region40: #{hr_temporal_block_forward.5} parent=5 // pred_fallthru
        _
    $region6: #{hr_temporal_block_forward.5} parent=1 // loop_footer
      %s16 = sadd.s32 1, %s12
    $region7: #{hr_temporal_block_forward.5} parent=1 // loop_footer_branch
      %11 = sbr.rel target = $region3
    $region8: #{hr_temporal_block_forward.5} parent=1 // loop_exit
      _
    %273 = vsyncpa [#allocation3], 1
    %s274 = scalar_lea.sflag [#allocation3], 1
    %275 = vsyncpa %s274, 1

// kernel: hr_temporal_block_forward.3
$region0: #{hr_temporal_block_forward.3}
  #allocation0 [shape = 'u32[]', space=smem, size = 0x4, offset = 0x4, fixed_abs, tag = 'smem constant byte address 0x4 - core index']
  #allocation1 [shape = 'u32[72,128]{1,0:T(1,128)}', space=vmem, size = 0x9000, scoped, tag = 'internal scratch']
  %s0 = inlined_call_operand.vmem [shape: f32[2,1,24,4], index: 0, kind: input, shape index: {}]
  %s1 = inlined_call_operand.vmem [shape: f32[3,4,128], index: 1, kind: input, shape index: {}]
  %s2 = inlined_call_operand.vmem [shape: f32[1,128], index: 2, kind: input, shape index: {}]
  %s3 = inlined_call_operand.vmem [shape: bf16[2,8,128], index: 3, kind: output, shape index: {}]
  %s4 = sld [smem:[#allocation0]]
  $region45: #{hr_temporal_block_forward.3} parent=0
    _
  %s6 = ssub.s32 1, %s4
  %s7 = scalar_select 0, %s6, %s4
  loop: start=0, step=1, limit=4
  $region2: #{hr_temporal_block_forward.3} parent=0 // loop_pre_header
    _
  $region3: #{hr_temporal_block_forward.3} parent=0 // loop_header
    %s9 = sphi 0, %s13
    %p10 = scmp.ge.s32.totalorder %s9, 4
    %s16 = sphi 0, %s28
    %s17 = sphi 0, %s24
    %s18 = sphi 0, %s16
    %s19 = sphi 0, %s17
    %s20 = sphi 0, %s18
    %s21 = sphi 0, %s19
    %s33 = sphi 0, %s35
    %s36 = sphi 0, %s33
    %s37 = sphi 0, %s36
    %s53 = sphi 0, %s37
    %s57 = sphi 0, %s57
    %s59 = sphi 0, %s57
    %s60 = sphi 0, %s59
    %s74 = sphi 0, %s60
    %s78 = sphi 0, %s78
    %s80 = sphi 0, %s78
    %s81 = sphi 0, %s80
    %s95 = sphi 0, %s81
    %s103 = sphi 0, %s105
    %s106 = sphi 0, %s103
    %s107 = sphi 0, %s106
    %s123 = sphi 0, %s107
  $region4: #{hr_temporal_block_forward.3} parent=0 // loop_header_branch
    %12 = sbr.rel (%p10) target = $region8
  $region5: #{hr_temporal_block_forward.3} parent=0 // loop_body
    %s14 = ssub.s32 %s9, 1
    %s15 = ssub.s32 %s9, 2
    %s22 = sadd.s32 1, %s17
    %p23 = scmp.ge.s32.totalorder %s22, 1
    %s24 = scalar_select %p23, 0, %s22
    %s25 = sadd.s32 1, %s16
    %s26 = scalar_select %p23, %s25, %s16
    %p27 = scmp.ge.s32.totalorder %s26, 2
    %s28 = scalar_select %p27, 0, %s26
    %s29 = ssub.s32 %s16, %s28
    %s30 = ssub.s32 %s17, %s24
    %s31 = sor.u32 %s29, %s30
    %p32 = scmp.eq.s32.totalorder %s31, 0
    %s34 = sadd.s32 %s33, 1
    %s35 = scalar_select %p32, %s33, %s34
    %p38 = pneg %p32
    %p39 = scmp.eq.s32.totalorder %s9, 1
    %p40 = por %p38, %p39
    %p41 = scmp.ne.s32.totalorder %s33, %s36
    %p42 = scmp.eq.s32.totalorder %s9, 0
    %p43 = por %p41, %p42
    %p44 = scmp.ne.s32.totalorder %s33, %s36
    %p45 = scmp.eq.s32.totalorder %s14, 1
    %p46 = por %p44, %p45
    %p47 = scmp.ne.s32.totalorder %s36, %s37
    %p48 = scmp.eq.s32.totalorder %s14, 0
    %p49 = por %p47, %p48
    %p50 = scmp.ne.s32.totalorder %s36, %s37
    %p51 = scmp.eq.s32.totalorder %s15, 1
    %p52 = por %p50, %p51
    %p54 = scmp.ne.s32.totalorder %s37, %s53
    %p55 = scmp.eq.s32.totalorder %s15, 0
    %p56 = por %p54, %p55
    %s58 = sadd.s32 %s57, 1
    %p61 = scmp.eq.s32.totalorder %s9, 1
    %p62 = scmp.ne.s32.totalorder %s57, %s59
    %p63 = scmp.eq.s32.totalorder %s9, 0
    %p64 = por %p62, %p63
    %p65 = scmp.ne.s32.totalorder %s57, %s59
    %p66 = scmp.eq.s32.totalorder %s14, 1
    %p67 = por %p65, %p66
    %p68 = scmp.ne.s32.totalorder %s59, %s60
    %p69 = scmp.eq.s32.totalorder %s14, 0
    %p70 = por %p68, %p69
    %p71 = scmp.ne.s32.totalorder %s59, %s60
    %p72 = scmp.eq.s32.totalorder %s15, 1
    %p73 = por %p71, %p72
    %p75 = scmp.ne.s32.totalorder %s60, %s74
    %p76 = scmp.eq.s32.totalorder %s15, 0
    %p77 = por %p75, %p76
    %s79 = sadd.s32 %s78, 1
    %p82 = scmp.eq.s32.totalorder %s9, 1
    %p83 = scmp.ne.s32.totalorder %s78, %s80
    %p84 = scmp.eq.s32.totalorder %s9, 0
    %p85 = por %p83, %p84
    %p86 = scmp.ne.s32.totalorder %s78, %s80
    %p87 = scmp.eq.s32.totalorder %s14, 1
    %p88 = por %p86, %p87
    %p89 = scmp.ne.s32.totalorder %s80, %s81
    %p90 = scmp.eq.s32.totalorder %s14, 0
    %p91 = por %p89, %p90
    %p92 = scmp.ne.s32.totalorder %s80, %s81
    %p93 = scmp.eq.s32.totalorder %s15, 1
    %p94 = por %p92, %p93
    %p96 = scmp.ne.s32.totalorder %s81, %s95
    %p97 = scmp.eq.s32.totalorder %s15, 0
    %p98 = por %p96, %p97
    %s99 = ssub.s32 %s16, %s28
    %s100 = ssub.s32 %s17, %s24
    %s101 = sor.u32 %s99, %s100
    %p102 = scmp.eq.s32.totalorder %s101, 0
    %s104 = sadd.s32 %s103, 1
    %s105 = scalar_select %p102, %s103, %s104
    %p108 = pneg %p102
    %p109 = scmp.eq.s32.totalorder %s9, 1
    %p110 = por %p108, %p109
    %p111 = scmp.ne.s32.totalorder %s103, %s106
    %p112 = scmp.eq.s32.totalorder %s9, 0
    %p113 = por %p111, %p112
    %p114 = scmp.ne.s32.totalorder %s103, %s106
    %p115 = scmp.eq.s32.totalorder %s14, 1
    %p116 = por %p114, %p115
    %p117 = scmp.ne.s32.totalorder %s106, %s107
    %p118 = scmp.eq.s32.totalorder %s14, 0
    %p119 = por %p117, %p118
    %p120 = scmp.ne.s32.totalorder %s106, %s107
    %p121 = scmp.eq.s32.totalorder %s15, 1
    %p122 = por %p120, %p121
    %p124 = scmp.ne.s32.totalorder %s107, %s123
    %p125 = scmp.eq.s32.totalorder %s15, 0
    %p126 = por %p124, %p125
    %p127 = scmp.le.s32.totalorder 1, %s9
    %p128 = scmp.lt.s32.totalorder %s9, 3
    %p129 = pnand %p127, %p128
    %p130 = pneg %p129
    // Predicated region
    $region9: #{hr_temporal_block_forward.3} parent=5 // pred_check
      _
    $region10: #{hr_temporal_block_forward.3} parent=5 // pred_check_branch
      %132 = sbr.rel (%p129) target = $region12
    $region11: #{hr_temporal_block_forward.3} parent=5 // pred_region
      %s133 = ssub.s32 %s9, 1
      // Predicated region
      $region13: #{hr_temporal_block_forward.3} parent=11 // pred_check
        %p134 = pneg %p70
      $region14: #{hr_temporal_block_forward.3} parent=11 // pred_check_branch
        %136 = sbr.rel (%p134) target = $region16
      $region15: #{hr_temporal_block_forward.3} parent=11 // pred_region
        _
      $region16: #{hr_temporal_block_forward.3} parent=11 // pred_fallthru
        _
      // Predicated region
      $region17: #{hr_temporal_block_forward.3} parent=11 // pred_check
        %p137 = pneg %p91
      $region18: #{hr_temporal_block_forward.3} parent=11 // pred_check_branch
        %139 = sbr.rel (%p137) target = $region20
      $region19: #{hr_temporal_block_forward.3} parent=11 // pred_region
        _
      $region20: #{hr_temporal_block_forward.3} parent=11 // pred_fallthru
        _
    $region12: #{hr_temporal_block_forward.3} parent=5 // pred_fallthru
      _
    %p140 = scmp.lt.s32.totalorder %s9, 2
    // Predicated region
    $region21: #{hr_temporal_block_forward.3} parent=5 // pred_check
      %p141 = pneg %p140
    $region22: #{hr_temporal_block_forward.3} parent=5 // pred_check_branch
      %143 = sbr.rel (%p141) target = $region24
    $region23: #{hr_temporal_block_forward.3} parent=5 // pred_region
      // Predicated region
      $region25: #{hr_temporal_block_forward.3} parent=23 // pred_check
        %p144 = pneg %p43
      $region26: #{hr_temporal_block_forward.3} parent=23 // pred_check_branch
        %146 = sbr.rel (%p144) target = $region28
      $region27: #{hr_temporal_block_forward.3} parent=23 // pred_region
        %p147 = scmp.lt.s32.totalorder %s16, 1
        %s148 = scalar_select %p147, %s16, 1
        %p149 = scmp.lt.s32.totalorder %s17, 0
        %s150 = scalar_select %p149, %s17, 0
        %s151 = smul.addr %s150, 3
        %s152 = smul.addr %s148, 3
        %s153 = sadd.s32 %s151, %s152
        %s154 = smul.addr %s153, 8
        %s155 = scalar_lea.vmem %s0, %s154
      $region28: #{hr_temporal_block_forward.3} parent=23 // pred_fallthru
        _
    $region24: #{hr_temporal_block_forward.3} parent=5 // pred_fallthru
      _
    %p156 = scmp.le.s32.totalorder 1, %s9
    %p157 = scmp.lt.s32.totalorder %s9, 3
    %p158 = pnand %p156, %p157
    %p159 = pneg %p158
    // Predicated region
    $region29: #{hr_temporal_block_forward.3} parent=5 // pred_check
      _
    $region30: #{hr_temporal_block_forward.3} parent=5 // pred_check_branch
      %161 = sbr.rel (%p158) target = $region32
    $region31: #{hr_temporal_block_forward.3} parent=5 // pred_region
      %s162 = ssub.s32 %s9, 1
      %p163 = scmp.lt.s32.totalorder %s18, 1
      %s164 = scalar_select %p163, %s18, 1
      %p165 = scmp.lt.s32.totalorder %s19, 0
      %s166 = scalar_select %p165, %s19, 0
      %s167 = smul.addr %s166, 3
      %s168 = smul.addr %s164, 3
      %s169 = sadd.s32 %s167, %s168
      %s170 = smul.addr %s169, 8
      %s171 = scalar_lea.vmem %s0, %s170
      %p172 = pneg %p49
      %p173 = pneg %p46
      %p174 = pneg %p70
      %p175 = pneg %p67
      %p176 = pneg %p91
      %p177 = pneg %p88
      %p178 = pneg %p119
      %p179 = pneg %p116
      %p180 = scmp.lt.s32.totalorder %s18, 1
      %s181 = scalar_select %p180, %s18, 1
      %p182 = scmp.lt.s32.totalorder %s19, 0
      %s183 = scalar_select %p182, %s19, 0
      %s184 = sadd.s32 %s183, %s181
      %s185 = smul.addr %s184, 4
      %s186 = scalar_lea.vmem %s3, %s185
      %p187 = scmp.lt.s32.totalorder %s18, 1
      %s188 = scalar_select %p187, %s18, 1
      %p189 = scmp.lt.s32.totalorder %s19, 0
      %s190 = scalar_select %p189, %s19, 0
      %s191 = smul.addr %s190, 3
      %s192 = smul.addr %s188, 3
      %s193 = sadd.s32 %s191, %s192
      %s194 = smul.addr %s193, 8
      %s195 = scalar_lea.vmem %s0, %s194
      %p196 = scmp.lt.s32.totalorder %s18, 1
      %s197 = scalar_select %p196, %s18, 1
      %p198 = scmp.lt.s32.totalorder %s19, 0
      %s199 = scalar_select %p198, %s19, 0
      %s200 = sadd.s32 %s199, %s197
      %s201 = smul.addr %s200, 4
      %s202 = scalar_lea.vmem %s3, %s201
      %v203 = vld [vmem:[%s195] ss:$2 sm:$0xff]
      %v204 = vld [vmem:[%s1] sm:$0xf]
      %s205 = scalar_lea.vmem %s195, 1
      %v206 = vld [vmem:[%s205] ss:$2 sm:$0xff]
      %s207 = scalar_lea.vmem %s1, 4
      %v208 = vld [vmem:[%s207] sm:$0xf]
      %vm209 = vcmask 31744
      %v211 = vsel %vm209, %v206, 0
      %vm213 = vcmask 1043456
      %v215 = vsel %vm213, %v208, 0
      %217 = vmatpush.msra.mxu0 0.0
      %218 = vmatpush.msra.mxu0 0.0
      %219 = vmatpush.msra.mxu0 0.0
      %220 = vmatpush.msra.mxu0 0.0
      %221 = vmatpush.msra.mxu0 0.0
      %222 = vmatpush.msra.mxu0 0.0
      %223 = vmatpush.msra.mxu0 0.0
      %224 = vmatpush.msra.mxu0 0.0
      %225 = vmatpush.msra.mxu0 0.0
      %226 = vmatpush.msra.mxu0 0.0
      %227 = vmatpush.msra.mxu0 0.0
      %228 = vmatpush.msra.mxu0 0.0
      %229 = vmatpush.msra.mxu0 0.0
      %230 = vmatpush.msra.mxu0 0.0
      %231 = vmatpush.msra.mxu0 0.0
      %232 = vmatpush.msra.mxu0 %v215
      %233 = vmatmul.f32.gmra.mxu0 %v211
      %v234 = vpop.f32.mrf.mxu0
      %v235 = vadd.f32 0.0, %v234
      %236 = vdwg.mxu0
      %v238 = vsel %vm209, %v203, 0
      %v241 = vsel %vm213, %v204, 0
      %243 = vmatpush.msra.mxu0 0.0
      %244 = vmatpush.msra.mxu0 0.0
      %245 = vmatpush.msra.mxu0 0.0
      %246 = vmatpush.msra.mxu0 0.0
      %247 = vmatpush.msra.mxu0 0.0
      %248 = vmatpush.msra.mxu0 0.0
      %249 = vmatpush.msra.mxu0 0.0
      %250 = vmatpush.msra.mxu0 0.0
      %251 = vmatpush.msra.mxu0 0.0
      %252 = vmatpush.msra.mxu0 0.0
      %253 = vmatpush.msra.mxu0 0.0
      %254 = vmatpush.msra.mxu0 0.0
      %255 = vmatpush.msra.mxu0 0.0
      %256 = vmatpush.msra.mxu0 0.0
      %257 = vmatpush.msra.mxu0 0.0
      %258 = vmatpush.msra.mxu0 %v241
      %259 = vmatmul.f32.gmra.mxu0 %v238
      %v260 = vpop.f32.mrf.mxu0
      %v261 = vadd.f32 %v235, %v260
      %262 = vdwg.mxu0
      %s263 = scalar_lea.vmem %s195, 2
      %v264 = vld [vmem:[%s263] ss:$2 sm:$0xff]
      %s265 = scalar_lea.vmem %s1, 8
      %v266 = vld [vmem:[%s265] sm:$0xf]
      %v268 = vsel %vm209, %v264, 0
      %v271 = vsel %vm213, %v266, 0
      %273 = vmatpush.msra.mxu0 0.0
      %274 = vmatpush.msra.mxu0 0.0
      %275 = vmatpush.msra.mxu0 0.0
      %276 = vmatpush.msra.mxu0 0.0
      %277 = vmatpush.msra.mxu0 0.0
      %278 = vmatpush.msra.mxu0 0.0
      %279 = vmatpush.msra.mxu0 0.0
      %280 = vmatpush.msra.mxu0 0.0
      %281 = vmatpush.msra.mxu0 0.0
      %282 = vmatpush.msra.mxu0 0.0
      %283 = vmatpush.msra.mxu0 0.0
      %284 = vmatpush.msra.mxu0 0.0
      %285 = vmatpush.msra.mxu0 0.0
      %286 = vmatpush.msra.mxu0 0.0
      %287 = vmatpush.msra.mxu0 0.0
      %288 = vmatpush.msra.mxu0 %v271
      %289 = vmatmul.f32.gmra.mxu0 %v268
      %v290 = vpop.f32.mrf.mxu0
      %v291 = vadd.f32 0.0, %v290
      %292 = vdwg.mxu0
      %v293 = vadd.f32 %v261, %v291
      %v294 = vld [vmem:[%s2] sm:$0x1]
      %v296 = vperm.slane %v294, 0
      %v298 = vadd.f32 %v293, %v296
      %v299 = vmax.f32 %v298, 0.0
      %v300 = vpack.c.bf16 %v299, %v299
      %301 = vst [vmem:[%s202] sm:$0xf] %v300
      %p302 = scmp.lt.s32.totalorder %s18, 1
      %s303 = scalar_select %p302, %s18, 1
      %p304 = scmp.lt.s32.totalorder %s19, 0
      %s305 = scalar_select %p304, %s19, 0
      %s306 = sadd.s32 %s305, %s303
      %s307 = smul.addr %s306, 4
      %s308 = scalar_lea.vmem %s3, %s307
      // Predicated region
      $region33: #{hr_temporal_block_forward.3} parent=31 // pred_check
        %p309 = pneg %p116
      $region34: #{hr_temporal_block_forward.3} parent=31 // pred_check_branch
        %311 = sbr.rel (%p309) target = $region36
      $region35: #{hr_temporal_block_forward.3} parent=31 // pred_region
        _
      $region36: #{hr_temporal_block_forward.3} parent=31 // pred_fallthru
        _
    $region32: #{hr_temporal_block_forward.3} parent=5 // pred_fallthru
      _
    %p312 = scmp.le.s32.totalorder 2, %s9
    // Predicated region
    $region37: #{hr_temporal_block_forward.3} parent=5 // pred_check
      %p313 = pneg %p312
    $region38: #{hr_temporal_block_forward.3} parent=5 // pred_check_branch
      %315 = sbr.rel (%p313) target = $region40
    $region39: #{hr_temporal_block_forward.3} parent=5 // pred_region
      %s316 = ssub.s32 %s9, 2
      // Predicated region
      $region41: #{hr_temporal_block_forward.3} parent=39 // pred_check
        %p317 = pneg %p122
      $region42: #{hr_temporal_block_forward.3} parent=39 // pred_check_branch
        %319 = sbr.rel (%p317) target = $region44
      $region43: #{hr_temporal_block_forward.3} parent=39 // pred_region
        %p320 = scmp.lt.s32.totalorder %s20, 1
        %s321 = scalar_select %p320, %s20, 1
        %p322 = scmp.lt.s32.totalorder %s21, 0
        %s323 = scalar_select %p322, %s21, 0
        %s324 = sadd.s32 %s323, %s321
        %s325 = smul.addr %s324, 4
        %s326 = scalar_lea.vmem %s3, %s325
      $region44: #{hr_temporal_block_forward.3} parent=39 // pred_fallthru
        _
    $region40: #{hr_temporal_block_forward.3} parent=5 // pred_fallthru
      _
  $region6: #{hr_temporal_block_forward.3} parent=0 // loop_footer
    %s13 = sadd.s32 1, %s9
  $region7: #{hr_temporal_block_forward.3} parent=0 // loop_footer_branch
    %8 = sbr.rel target = $region3
  $region8: #{hr_temporal_block_forward.3} parent=0 // loop_exit
    _

// kernel: hr_temporal_block_forward.4
$region0: #{hr_temporal_block_forward.4}
  #allocation0 [shape = 'u32[]', space=smem, size = 0x4, offset = 0x4, fixed_abs, tag = 'smem constant byte address 0x4 - core index']
  #allocation1 [shape = 'u32[72,128]{1,0:T(1,128)}', space=vmem, size = 0x9000, scoped, tag = 'internal scratch']
  %s0 = inlined_call_operand.vmem [shape: bf16[2,1,16,128], index: 0, kind: input, shape index: {}]
  %s1 = inlined_call_operand.vmem [shape: bf16[3,128,128], index: 1, kind: input, shape index: {}]
  %s2 = inlined_call_operand.vmem [shape: f32[1,128], index: 2, kind: input, shape index: {}]
  %s3 = inlined_call_operand.vmem [shape: f32[2,8,4], index: 3, kind: input, shape index: {}]
  %s4 = inlined_call_operand.vmem [shape: f32[4,128], index: 4, kind: input, shape index: {}]
  %s5 = inlined_call_operand.vmem [shape: f32[1,128], index: 5, kind: input, shape index: {}]
  %s6 = inlined_call_operand.vmem [shape: bf16[2,8,128], index: 6, kind: output, shape index: {0}]
  %s7 = inlined_call_operand.vmem [shape: f32[2,1,128], index: 7, kind: output, shape index: {1}]
  %s8 = inlined_call_operand.vmem [shape: f32[2,1,128], index: 8, kind: output, shape index: {2}]
  %9 = xla_tuple %s6, %s7, %s8
  %s10 = sld [smem:[#allocation0]]
  $region77: #{hr_temporal_block_forward.4} parent=0
    _
  %s12 = ssub.s32 1, %s10
  %s13 = scalar_select 0, %s12, %s10
  loop: start=0, step=1, limit=4
  $region2: #{hr_temporal_block_forward.4} parent=0 // loop_pre_header
    _
  $region3: #{hr_temporal_block_forward.4} parent=0 // loop_header
    %s15 = sphi 0, %s19
    %p16 = scmp.ge.s32.totalorder %s15, 4
    %s22 = sphi 0, %s34
    %s23 = sphi 0, %s30
    %s24 = sphi 0, %s22
    %s25 = sphi 0, %s23
    %s26 = sphi 0, %s24
    %s27 = sphi 0, %s25
    %s39 = sphi 0, %s41
    %s42 = sphi 0, %s39
    %s43 = sphi 0, %s42
    %s59 = sphi 0, %s43
    %s63 = sphi 0, %s63
    %s65 = sphi 0, %s63
    %s66 = sphi 0, %s65
    %s80 = sphi 0, %s66
    %s84 = sphi 0, %s84
    %s86 = sphi 0, %s84
    %s87 = sphi 0, %s86
    %s101 = sphi 0, %s87
    %s109 = sphi 0, %s111
    %s112 = sphi 0, %s109
    %s113 = sphi 0, %s112
    %s129 = sphi 0, %s113
    %s133 = sphi 0, %s133
    %s135 = sphi 0, %s133
    %s136 = sphi 0, %s135
    %s150 = sphi 0, %s136
    %s154 = sphi 0, %s154
    %s156 = sphi 0, %s154
    %s157 = sphi 0, %s156
    %s171 = sphi 0, %s157
    %s179 = sphi 0, %s181
    %s182 = sphi 0, %s179
    %s183 = sphi 0, %s182
    %s199 = sphi 0, %s183
    %s205 = sphi 0, %s207
    %s208 = sphi 0, %s205
    %s209 = sphi 0, %s208
    %s225 = sphi 0, %s209
    %s231 = sphi 0, %s233
    %s234 = sphi 0, %s231
    %s235 = sphi 0, %s234
    %s251 = sphi 0, %s235
  $region4: #{hr_temporal_block_forward.4} parent=0 // loop_header_branch
    %18 = sbr.rel (%p16) target = $region8
  $region5: #{hr_temporal_block_forward.4} parent=0 // loop_body
    %s20 = ssub.s32 %s15, 1
    %s21 = ssub.s32 %s15, 2
    %s28 = sadd.s32 1, %s23
    %p29 = scmp.ge.s32.totalorder %s28, 1
    %s30 = scalar_select %p29, 0, %s28
    %s31 = sadd.s32 1, %s22
    %s32 = scalar_select %p29, %s31, %s22
    %p33 = scmp.ge.s32.totalorder %s32, 2
    %s34 = scalar_select %p33, 0, %s32
    %s35 = ssub.s32 %s22, %s34
    %s36 = ssub.s32 %s23, %s30
    %s37 = sor.u32 %s35, %s36
    %p38 = scmp.eq.s32.totalorder %s37, 0
    %s40 = sadd.s32 %s39, 1
    %s41 = scalar_select %p38, %s39, %s40
    %p44 = pneg %p38
    %p45 = scmp.eq.s32.totalorder %s15, 1
    %p46 = por %p44, %p45
    %p47 = scmp.ne.s32.totalorder %s39, %s42
    %p48 = scmp.eq.s32.totalorder %s15, 0
    %p49 = por %p47, %p48
    %p50 = scmp.ne.s32.totalorder %s39, %s42
    %p51 = scmp.eq.s32.totalorder %s20, 1
    %p52 = por %p50, %p51
    %p53 = scmp.ne.s32.totalorder %s42, %s43
    %p54 = scmp.eq.s32.totalorder %s20, 0
    %p55 = por %p53, %p54
    %p56 = scmp.ne.s32.totalorder %s42, %s43
    %p57 = scmp.eq.s32.totalorder %s21, 1
    %p58 = por %p56, %p57
    %p60 = scmp.ne.s32.totalorder %s43, %s59
    %p61 = scmp.eq.s32.totalorder %s21, 0
    %p62 = por %p60, %p61
    %s64 = sadd.s32 %s63, 1
    %p67 = scmp.eq.s32.totalorder %s15, 1
    %p68 = scmp.ne.s32.totalorder %s63, %s65
    %p69 = scmp.eq.s32.totalorder %s15, 0
    %p70 = por %p68, %p69
    %p71 = scmp.ne.s32.totalorder %s63, %s65
    %p72 = scmp.eq.s32.totalorder %s20, 1
    %p73 = por %p71, %p72
    %p74 = scmp.ne.s32.totalorder %s65, %s66
    %p75 = scmp.eq.s32.totalorder %s20, 0
    %p76 = por %p74, %p75
    %p77 = scmp.ne.s32.totalorder %s65, %s66
    %p78 = scmp.eq.s32.totalorder %s21, 1
    %p79 = por %p77, %p78
    %p81 = scmp.ne.s32.totalorder %s66, %s80
    %p82 = scmp.eq.s32.totalorder %s21, 0
    %p83 = por %p81, %p82
    %s85 = sadd.s32 %s84, 1
    %p88 = scmp.eq.s32.totalorder %s15, 1
    %p89 = scmp.ne.s32.totalorder %s84, %s86
    %p90 = scmp.eq.s32.totalorder %s15, 0
    %p91 = por %p89, %p90
    %p92 = scmp.ne.s32.totalorder %s84, %s86
    %p93 = scmp.eq.s32.totalorder %s20, 1
    %p94 = por %p92, %p93
    %p95 = scmp.ne.s32.totalorder %s86, %s87
    %p96 = scmp.eq.s32.totalorder %s20, 0
    %p97 = por %p95, %p96
    %p98 = scmp.ne.s32.totalorder %s86, %s87
    %p99 = scmp.eq.s32.totalorder %s21, 1
    %p100 = por %p98, %p99
    %p102 = scmp.ne.s32.totalorder %s87, %s101
    %p103 = scmp.eq.s32.totalorder %s21, 0
    %p104 = por %p102, %p103
    %s105 = ssub.s32 %s22, %s34
    %s106 = ssub.s32 %s23, %s30
    %s107 = sor.u32 %s105, %s106
    %p108 = scmp.eq.s32.totalorder %s107, 0
    %s110 = sadd.s32 %s109, 1
    %s111 = scalar_select %p108, %s109, %s110
    %p114 = pneg %p108
    %p115 = scmp.eq.s32.totalorder %s15, 1
    %p116 = por %p114, %p115
    %p117 = scmp.ne.s32.totalorder %s109, %s112
    %p118 = scmp.eq.s32.totalorder %s15, 0
    %p119 = por %p117, %p118
    %p120 = scmp.ne.s32.totalorder %s109, %s112
    %p121 = scmp.eq.s32.totalorder %s20, 1
    %p122 = por %p120, %p121
    %p123 = scmp.ne.s32.totalorder %s112, %s113
    %p124 = scmp.eq.s32.totalorder %s20, 0
    %p125 = por %p123, %p124
    %p126 = scmp.ne.s32.totalorder %s112, %s113
    %p127 = scmp.eq.s32.totalorder %s21, 1
    %p128 = por %p126, %p127
    %p130 = scmp.ne.s32.totalorder %s113, %s129
    %p131 = scmp.eq.s32.totalorder %s21, 0
    %p132 = por %p130, %p131
    %s134 = sadd.s32 %s133, 1
    %p137 = scmp.eq.s32.totalorder %s15, 1
    %p138 = scmp.ne.s32.totalorder %s133, %s135
    %p139 = scmp.eq.s32.totalorder %s15, 0
    %p140 = por %p138, %p139
    %p141 = scmp.ne.s32.totalorder %s133, %s135
    %p142 = scmp.eq.s32.totalorder %s20, 1
    %p143 = por %p141, %p142
    %p144 = scmp.ne.s32.totalorder %s135, %s136
    %p145 = scmp.eq.s32.totalorder %s20, 0
    %p146 = por %p144, %p145
    %p147 = scmp.ne.s32.totalorder %s135, %s136
    %p148 = scmp.eq.s32.totalorder %s21, 1
    %p149 = por %p147, %p148
    %p151 = scmp.ne.s32.totalorder %s136, %s150
    %p152 = scmp.eq.s32.totalorder %s21, 0
    %p153 = por %p151, %p152
    %s155 = sadd.s32 %s154, 1
    %p158 = scmp.eq.s32.totalorder %s15, 1
    %p159 = scmp.ne.s32.totalorder %s154, %s156
    %p160 = scmp.eq.s32.totalorder %s15, 0
    %p161 = por %p159, %p160
    %p162 = scmp.ne.s32.totalorder %s154, %s156
    %p163 = scmp.eq.s32.totalorder %s20, 1
    %p164 = por %p162, %p163
    %p165 = scmp.ne.s32.totalorder %s156, %s157
    %p166 = scmp.eq.s32.totalorder %s20, 0
    %p167 = por %p165, %p166
    %p168 = scmp.ne.s32.totalorder %s156, %s157
    %p169 = scmp.eq.s32.totalorder %s21, 1
    %p170 = por %p168, %p169
    %p172 = scmp.ne.s32.totalorder %s157, %s171
    %p173 = scmp.eq.s32.totalorder %s21, 0
    %p174 = por %p172, %p173
    %s175 = ssub.s32 %s22, %s34
    %s176 = ssub.s32 %s23, %s30
    %s177 = sor.u32 %s175, %s176
    %p178 = scmp.eq.s32.totalorder %s177, 0
    %s180 = sadd.s32 %s179, 1
    %s181 = scalar_select %p178, %s179, %s180
    %p184 = pneg %p178
    %p185 = scmp.eq.s32.totalorder %s15, 1
    %p186 = por %p184, %p185
    %p187 = scmp.ne.s32.totalorder %s179, %s182
    %p188 = scmp.eq.s32.totalorder %s15, 0
    %p189 = por %p187, %p188
    %p190 = scmp.ne.s32.totalorder %s179, %s182
    %p191 = scmp.eq.s32.totalorder %s20, 1
    %p192 = por %p190, %p191
    %p193 = scmp.ne.s32.totalorder %s182, %s183
    %p194 = scmp.eq.s32.totalorder %s20, 0
    %p195 = por %p193, %p194
    %p196 = scmp.ne.s32.totalorder %s182, %s183
    %p197 = scmp.eq.s32.totalorder %s21, 1
    %p198 = por %p196, %p197
    %p200 = scmp.ne.s32.totalorder %s183, %s199
    %p201 = scmp.eq.s32.totalorder %s21, 0
    %p202 = por %p200, %p201
    %s203 = ssub.s32 %s22, %s34
    %p204 = scmp.eq.s32.totalorder %s203, 0
    %s206 = sadd.s32 %s205, 1
    %s207 = scalar_select %p204, %s205, %s206
    %p210 = pneg %p204
    %p211 = scmp.eq.s32.totalorder %s15, 1
    %p212 = por %p210, %p211
    %p213 = scmp.ne.s32.totalorder %s205, %s208
    %p214 = scmp.eq.s32.totalorder %s15, 0
    %p215 = por %p213, %p214
    %p216 = scmp.ne.s32.totalorder %s205, %s208
    %p217 = scmp.eq.s32.totalorder %s20, 1
    %p218 = por %p216, %p217
    %p219 = scmp.ne.s32.totalorder %s208, %s209
    %p220 = scmp.eq.s32.totalorder %s20, 0
    %p221 = por %p219, %p220
    %p222 = scmp.ne.s32.totalorder %s208, %s209
    %p223 = scmp.eq.s32.totalorder %s21, 1
    %p224 = por %p222, %p223
    %p226 = scmp.ne.s32.totalorder %s209, %s225
    %p227 = scmp.eq.s32.totalorder %s21, 0
    %p228 = por %p226, %p227
    %s229 = ssub.s32 %s22, %s34
    %p230 = scmp.eq.s32.totalorder %s229, 0
    %s232 = sadd.s32 %s231, 1
    %s233 = scalar_select %p230, %s231, %s232
    %p236 = pneg %p230
    %p237 = scmp.eq.s32.totalorder %s15, 1
    %p238 = por %p236, %p237
    %p239 = scmp.ne.s32.totalorder %s231, %s234
    %p240 = scmp.eq.s32.totalorder %s15, 0
    %p241 = por %p239, %p240
    %p242 = scmp.ne.s32.totalorder %s231, %s234
    %p243 = scmp.eq.s32.totalorder %s20, 1
    %p244 = por %p242, %p243
    %p245 = scmp.ne.s32.totalorder %s234, %s235
    %p246 = scmp.eq.s32.totalorder %s20, 0
    %p247 = por %p245, %p246
    %p248 = scmp.ne.s32.totalorder %s234, %s235
    %p249 = scmp.eq.s32.totalorder %s21, 1
    %p250 = por %p248, %p249
    %p252 = scmp.ne.s32.totalorder %s235, %s251
    %p253 = scmp.eq.s32.totalorder %s21, 0
    %p254 = por %p252, %p253
    %p255 = scmp.le.s32.totalorder 1, %s15
    %p256 = scmp.lt.s32.totalorder %s15, 3
    %p257 = pnand %p255, %p256
    %p258 = pneg %p257
    // Predicated region
    $region9: #{hr_temporal_block_forward.4} parent=5 // pred_check
      _
    $region10: #{hr_temporal_block_forward.4} parent=5 // pred_check_branch
      %260 = sbr.rel (%p257) target = $region12
    $region11: #{hr_temporal_block_forward.4} parent=5 // pred_region
      %s261 = ssub.s32 %s15, 1
      // Predicated region
      $region13: #{hr_temporal_block_forward.4} parent=11 // pred_check
        %p262 = pneg %p76
      $region14: #{hr_temporal_block_forward.4} parent=11 // pred_check_branch
        %264 = sbr.rel (%p262) target = $region16
      $region15: #{hr_temporal_block_forward.4} parent=11 // pred_region
        _
      $region16: #{hr_temporal_block_forward.4} parent=11 // pred_fallthru
        _
      // Predicated region
      $region17: #{hr_temporal_block_forward.4} parent=11 // pred_check
        %p265 = pneg %p97
      $region18: #{hr_temporal_block_forward.4} parent=11 // pred_check_branch
        %267 = sbr.rel (%p265) target = $region20
      $region19: #{hr_temporal_block_forward.4} parent=11 // pred_region
        _
      $region20: #{hr_temporal_block_forward.4} parent=11 // pred_fallthru
        _
      // Predicated region
      $region21: #{hr_temporal_block_forward.4} parent=11 // pred_check
        %p268 = pneg %p146
      $region22: #{hr_temporal_block_forward.4} parent=11 // pred_check_branch
        %270 = sbr.rel (%p268) target = $region24
      $region23: #{hr_temporal_block_forward.4} parent=11 // pred_region
        _
      $region24: #{hr_temporal_block_forward.4} parent=11 // pred_fallthru
        _
      // Predicated region
      $region25: #{hr_temporal_block_forward.4} parent=11 // pred_check
        %p271 = pneg %p167
      $region26: #{hr_temporal_block_forward.4} parent=11 // pred_check_branch
        %273 = sbr.rel (%p271) target = $region28
      $region27: #{hr_temporal_block_forward.4} parent=11 // pred_region
        _
      $region28: #{hr_temporal_block_forward.4} parent=11 // pred_fallthru
        _
    $region12: #{hr_temporal_block_forward.4} parent=5 // pred_fallthru
      _
    %p274 = scmp.lt.s32.totalorder %s15, 2
    // Predicated region
    $region29: #{hr_temporal_block_forward.4} parent=5 // pred_check
      %p275 = pneg %p274
    $region30: #{hr_temporal_block_forward.4} parent=5 // pred_check_branch
      %277 = sbr.rel (%p275) target = $region32
    $region31: #{hr_temporal_block_forward.4} parent=5 // pred_region
      // Predicated region
      $region33: #{hr_temporal_block_forward.4} parent=31 // pred_check
        %p278 = pneg %p49
      $region34: #{hr_temporal_block_forward.4} parent=31 // pred_check_branch
        %280 = sbr.rel (%p278) target = $region36
      $region35: #{hr_temporal_block_forward.4} parent=31 // pred_region
        %p281 = scmp.lt.s32.totalorder %s22, 1
        %s282 = scalar_select %p281, %s22, 1
        %p283 = scmp.lt.s32.totalorder %s23, 0
        %s284 = scalar_select %p283, %s23, 0
        %s285 = smul.addr %s284, 2
        %s286 = smul.addr %s282, 2
        %s287 = sadd.s32 %s285, %s286
        %s288 = smul.addr %s287, 4
        %s289 = scalar_lea.vmem %s0, %s288
      $region36: #{hr_temporal_block_forward.4} parent=31 // pred_fallthru
        _
      // Predicated region
      $region37: #{hr_temporal_block_forward.4} parent=31 // pred_check
        %p290 = pneg %p119
      $region38: #{hr_temporal_block_forward.4} parent=31 // pred_check_branch
        %292 = sbr.rel (%p290) target = $region40
      $region39: #{hr_temporal_block_forward.4} parent=31 // pred_region
        %p293 = scmp.lt.s32.totalorder %s22, 1
        %s294 = scalar_select %p293, %s22, 1
        %p295 = scmp.lt.s32.totalorder %s23, 0
        %s296 = scalar_select %p295, %s23, 0
        %s297 = sadd.s32 %s296, %s294
        %s298 = smul.addr %s297, 8
        %s299 = scalar_lea.vmem %s3, %s298
      $region40: #{hr_temporal_block_forward.4} parent=31 // pred_fallthru
        _
    $region32: #{hr_temporal_block_forward.4} parent=5 // pred_fallthru
      _
    %p300 = scmp.le.s32.totalorder 1, %s15
    %p301 = scmp.lt.s32.totalorder %s15, 3
    %p302 = pnand %p300, %p301
    %p303 = pneg %p302
    // Predicated region
    $region41: #{hr_temporal_block_forward.4} parent=5 // pred_check
      _
    $region42: #{hr_temporal_block_forward.4} parent=5 // pred_check_branch
      %305 = sbr.rel (%p302) target = $region44
    $region43: #{hr_temporal_block_forward.4} parent=5 // pred_region
      %s306 = ssub.s32 %s15, 1
      %p307 = scmp.lt.s32.totalorder %s24, 1
      %s308 = scalar_select %p307, %s24, 1
      %p309 = scmp.lt.s32.totalorder %s25, 0
      %s310 = scalar_select %p309, %s25, 0
      %s311 = smul.addr %s310, 2
      %s312 = smul.addr %s308, 2
      %s313 = sadd.s32 %s311, %s312
      %s314 = smul.addr %s313, 4
      %s315 = scalar_lea.vmem %s0, %s314
      %p316 = pneg %p55
      %p317 = pneg %p52
      %p318 = pneg %p76
      %p319 = pneg %p73
      %p320 = pneg %p97
      %p321 = pneg %p94
      %p322 = scmp.lt.s32.totalorder %s24, 1
      %s323 = scalar_select %p322, %s24, 1
      %p324 = scmp.lt.s32.totalorder %s25, 0
      %s325 = scalar_select %p324, %s25, 0
      %s326 = sadd.s32 %s325, %s323
      %s327 = smul.addr %s326, 8
      %s328 = scalar_lea.vmem %s3, %s327
      %p329 = pneg %p125
      %p330 = pneg %p122
      %p331 = pneg %p146
      %p332 = pneg %p143
      %p333 = pneg %p167
      %p334 = pneg %p164
      %p335 = pneg %p195
      %p336 = pneg %p192
      %p337 = scmp.lt.s32.totalorder %s24, 1
      %s338 = scalar_select %p337, %s24, 1
      %p339 = scmp.lt.s32.totalorder %s25, 0
      %s340 = scalar_select %p339, %s25, 0
      %s341 = sadd.s32 %s340, %s338
      %s342 = smul.addr %s341, 4
      %s343 = scalar_lea.vmem %s6, %s342
      %p344 = pneg %p221
      %p345 = pneg %p218
      %p346 = scmp.lt.s32.totalorder %s24, 1
      %s347 = scalar_select %p346, %s24, 1
      %s348 = scalar_lea.vmem %s7, %s347
      %p349 = pneg %p247
      %p350 = pneg %p244
      %p351 = scmp.lt.s32.totalorder %s24, 1
      %s352 = scalar_select %p351, %s24, 1
      %s353 = scalar_lea.vmem %s8, %s352
      %p354 = scmp.lt.s32.totalorder %s24, 1
      %s355 = scalar_select %p354, %s24, 1
      %p356 = scmp.lt.s32.totalorder %s25, 0
      %s357 = scalar_select %p356, %s25, 0
      %s358 = smul.addr %s357, 2
      %s359 = smul.addr %s355, 2
      %s360 = sadd.s32 %s358, %s359
      %s361 = smul.addr %s360, 4
      %s362 = scalar_lea.vmem %s0, %s361
      %p363 = scmp.lt.s32.totalorder %s24, 1
      %s364 = scalar_select %p363, %s24, 1
      %p365 = scmp.lt.s32.totalorder %s25, 0
      %s366 = scalar_select %p365, %s25, 0
      %s367 = sadd.s32 %s366, %s364
      %s368 = smul.addr %s367, 8
      %s369 = scalar_lea.vmem %s3, %s368
      %p370 = scmp.lt.s32.totalorder %s24, 1
      %s371 = scalar_select %p370, %s24, 1
      %p372 = scmp.lt.s32.totalorder %s25, 0
      %s373 = scalar_select %p372, %s25, 0
      %s374 = sadd.s32 %s373, %s371
      %s375 = smul.addr %s374, 4
      %s376 = scalar_lea.vmem %s6, %s375
      %p377 = scmp.lt.s32.totalorder %s24, 1
      %s378 = scalar_select %p377, %s24, 1
      %s379 = scalar_lea.vmem %s7, %s378
      %p380 = scmp.lt.s32.totalorder %s24, 1
      %s381 = scalar_select %p380, %s24, 1
      %s382 = scalar_lea.vmem %s8, %s381
      %p383 = scmp.eq.s32.totalorder %s25, 0
      // Predicated region
      $region45: #{hr_temporal_block_forward.4} parent=43 // pred_check
        %p384 = pneg %p383
      $region46: #{hr_temporal_block_forward.4} parent=43 // pred_check_branch
        %386 = sbr.rel (%p384) target = $region48
      $region47: #{hr_temporal_block_forward.4} parent=43 // pred_region
        %387 = vst [vmem:[%s379] sm:$0x1] 0.0
        %388 = vst [vmem:[%s382] sm:$0x1] 0.0
      $region48: #{hr_temporal_block_forward.4} parent=43 // pred_fallthru
        _
      %v389 = vld [vmem:[%s362] sm:$0xf]
      %v390 = vld [vmem:[%s362 + $0x4] sm:$0xf]
      %v391 = vld [vmem:[%s1] sm:$0xf]
      %v392 = vld [vmem:[%s1 + $0x4] sm:$0xf]
      %v393 = vld [vmem:[%s1 + $0x8] sm:$0xf]
      %v394 = vld [vmem:[%s1 + $0xc] sm:$0xf]
      %v395 = vld [vmem:[%s1 + $0x10] sm:$0xf]
      %v396 = vld [vmem:[%s1 + $0x14] sm:$0xf]
      %v397 = vld [vmem:[%s1 + $0x18] sm:$0xf]
      %v398 = vld [vmem:[%s1 + $0x1c] sm:$0xf]
      %v399 = vld [vmem:[%s1 + $0x20] sm:$0xf]
      %v400 = vld [vmem:[%s1 + $0x24] sm:$0xf]
      %v401 = vld [vmem:[%s1 + $0x28] sm:$0xf]
      %v402 = vld [vmem:[%s1 + $0x2c] sm:$0xf]
      %v403 = vld [vmem:[%s1 + $0x30] sm:$0xf]
      %v404 = vld [vmem:[%s1 + $0x34] sm:$0xf]
      %v405 = vld [vmem:[%s1 + $0x38] sm:$0xf]
      %v406 = vld [vmem:[%s1 + $0x3c] sm:$0xf]
      %s407 = scalar_lea.vmem %s1, 64
      %v408 = vld [vmem:[%s407] sm:$0xf]
      %v409 = vld [vmem:[%s407 + $0x4] sm:$0xf]
      %v410 = vld [vmem:[%s407 + $0x8] sm:$0xf]
      %v411 = vld [vmem:[%s407 + $0xc] sm:$0xf]
      %v412 = vld [vmem:[%s407 + $0x10] sm:$0xf]
      %v413 = vld [vmem:[%s407 + $0x14] sm:$0xf]
      %v414 = vld [vmem:[%s407 + $0x18] sm:$0xf]
      %v415 = vld [vmem:[%s407 + $0x1c] sm:$0xf]
      %v416 = vld [vmem:[%s407 + $0x20] sm:$0xf]
      %v417 = vld [vmem:[%s407 + $0x24] sm:$0xf]
      %v418 = vld [vmem:[%s407 + $0x28] sm:$0xf]
      %v419 = vld [vmem:[%s407 + $0x2c] sm:$0xf]
      %v420 = vld [vmem:[%s407 + $0x30] sm:$0xf]
      %v421 = vld [vmem:[%s407 + $0x34] sm:$0xf]
      %v422 = vld [vmem:[%s407 + $0x38] sm:$0xf]
      %v423 = vld [vmem:[%s407 + $0x3c] sm:$0xf]
      %v426 = vunpack.c.l.b16 %v389
      %v427 = vunpack.c.l.b16 %v390
      %v428 = vpack.c.b16 %v427, %v426
      %v430 = vshrl.u32 %v428, 16
      %v432 = vshll.u32 %v428, 16
      %v434 = vrot.slane %v432, 1
      %v435 = vor.u32 %v430, %v434
      %v453 = vunpack.c.l.b16 %v408
      %v454 = vunpack.c.l.b16 %v409
      %v455 = vunpack.c.l.b16 %v410
      %v456 = vunpack.c.l.b16 %v411
      %v457 = vunpack.c.l.b16 %v412
      %v458 = vunpack.c.l.b16 %v413
      %v459 = vunpack.c.l.b16 %v414
      %v460 = vunpack.c.l.b16 %v415
      %v461 = vunpack.c.l.b16 %v416
      %v462 = vunpack.c.l.b16 %v417
      %v463 = vunpack.c.l.b16 %v418
      %v464 = vunpack.c.l.b16 %v419
      %v465 = vunpack.c.l.b16 %v420
      %v466 = vunpack.c.l.b16 %v421
      %v467 = vunpack.c.l.b16 %v422
      %v468 = vunpack.c.l.b16 %v423
      %v469 = vpack.c.b16 %v454, %v453
      %v470 = vpack.c.b16 %v456, %v455
      %v471 = vpack.c.b16 %v458, %v457
      %v472 = vpack.c.b16 %v460, %v459
      %v473 = vpack.c.b16 %v462, %v461
      %v474 = vpack.c.b16 %v464, %v463
      %v475 = vpack.c.b16 %v466, %v465
      %v476 = vpack.c.b16 %v468, %v467
      %485 = vmatpush.bf16.msra.mxu0 %v476
      %486 = vmatpush.bf16.msra.mxu0 %v475
      %487 = vmatpush.bf16.msra.mxu0 %v474
      %488 = vmatpush.bf16.msra.mxu0 %v473
      %489 = vmatpush.bf16.msra.mxu0 %v472
      %490 = vmatpush.bf16.msra.mxu0 %v471
      %491 = vmatpush.bf16.msra.mxu0 %v470
      %492 = vmatpush.bf16.msra.mxu0 %v469
      %493 = vmatmul.bf16.gmra.mxu0 %v435
      %v494 = vpop.f32.mrf.mxu0
      %v495 = vadd.f32 0.0, %v494
      %v496 = vpop.f32.mrf.mxu0
      %497 = vdwg.mxu0
      %v514 = vunpack.c.l.b16 %v391
      %v515 = vunpack.c.l.b16 %v392
      %v516 = vunpack.c.l.b16 %v393
      %v517 = vunpack.c.l.b16 %v394
      %v518 = vunpack.c.l.b16 %v395
      %v519 = vunpack.c.l.b16 %v396
      %v520 = vunpack.c.l.b16 %v397
      %v521 = vunpack.c.l.b16 %v398
      %v522 = vunpack.c.l.b16 %v399
      %v523 = vunpack.c.l.b16 %v400
      %v524 = vunpack.c.l.b16 %v401
      %v525 = vunpack.c.l.b16 %v402
      %v526 = vunpack.c.l.b16 %v403
      %v527 = vunpack.c.l.b16 %v404
      %v528 = vunpack.c.l.b16 %v405
      %v529 = vunpack.c.l.b16 %v406
      %v530 = vpack.c.b16 %v515, %v514
      %v531 = vpack.c.b16 %v517, %v516
      %v532 = vpack.c.b16 %v519, %v518
      %v533 = vpack.c.b16 %v521, %v520
      %v534 = vpack.c.b16 %v523, %v522
      %v535 = vpack.c.b16 %v525, %v524
      %v536 = vpack.c.b16 %v527, %v526
      %v537 = vpack.c.b16 %v529, %v528
      %546 = vmatpush.bf16.msra.mxu0 %v537
      %547 = vmatpush.bf16.msra.mxu0 %v536
      %548 = vmatpush.bf16.msra.mxu0 %v535
      %549 = vmatpush.bf16.msra.mxu0 %v534
      %550 = vmatpush.bf16.msra.mxu0 %v533
      %551 = vmatpush.bf16.msra.mxu0 %v532
      %552 = vmatpush.bf16.msra.mxu0 %v531
      %553 = vmatpush.bf16.msra.mxu0 %v530
      %554 = vmatmul.bf16.gmra.mxu0 %v389
      %v555 = vpop.f32.mrf.mxu0
      %v556 = vadd.f32 %v495, %v555
      %v557 = vpop.f32.mrf.mxu0
      %558 = vdwg.mxu0
      %s559 = scalar_lea.vmem %s1, 128
      %v560 = vld [vmem:[%s559] sm:$0xf]
      %v561 = vld [vmem:[%s559 + $0x4] sm:$0xf]
      %v562 = vld [vmem:[%s559 + $0x8] sm:$0xf]
      %v563 = vld [vmem:[%s559 + $0xc] sm:$0xf]
      %v564 = vld [vmem:[%s559 + $0x10] sm:$0xf]
      %v565 = vld [vmem:[%s559 + $0x14] sm:$0xf]
      %v566 = vld [vmem:[%s559 + $0x18] sm:$0xf]
      %v567 = vld [vmem:[%s559 + $0x1c] sm:$0xf]
      %v568 = vld [vmem:[%s559 + $0x20] sm:$0xf]
      %v569 = vld [vmem:[%s559 + $0x24] sm:$0xf]
      %v570 = vld [vmem:[%s559 + $0x28] sm:$0xf]
      %v571 = vld [vmem:[%s559 + $0x2c] sm:$0xf]
      %v572 = vld [vmem:[%s559 + $0x30] sm:$0xf]
      %v573 = vld [vmem:[%s559 + $0x34] sm:$0xf]
      %v574 = vld [vmem:[%s559 + $0x38] sm:$0xf]
      %v575 = vld [vmem:[%s559 + $0x3c] sm:$0xf]
      %v576 = vrot.slane %v428, 1
      %v594 = vunpack.c.l.b16 %v560
      %v595 = vunpack.c.l.b16 %v561
      %v596 = vunpack.c.l.b16 %v562
      %v597 = vunpack.c.l.b16 %v563
      %v598 = vunpack.c.l.b16 %v564
      %v599 = vunpack.c.l.b16 %v565
      %v600 = vunpack.c.l.b16 %v566
      %v601 = vunpack.c.l.b16 %v567
      %v602 = vunpack.c.l.b16 %v568
      %v603 = vunpack.c.l.b16 %v569
      %v604 = vunpack.c.l.b16 %v570
      %v605 = vunpack.c.l.b16 %v571
      %v606 = vunpack.c.l.b16 %v572
      %v607 = vunpack.c.l.b16 %v573
      %v608 = vunpack.c.l.b16 %v574
      %v609 = vunpack.c.l.b16 %v575
      %v610 = vpack.c.b16 %v595, %v594
      %v611 = vpack.c.b16 %v597, %v596
      %v612 = vpack.c.b16 %v599, %v598
      %v613 = vpack.c.b16 %v601, %v600
      %v614 = vpack.c.b16 %v603, %v602
      %v615 = vpack.c.b16 %v605, %v604
      %v616 = vpack.c.b16 %v607, %v606
      %v617 = vpack.c.b16 %v609, %v608
      %626 = vmatpush.bf16.msra.mxu0 %v617
      %627 = vmatpush.bf16.msra.mxu0 %v616
      %628 = vmatpush.bf16.msra.mxu0 %v615
      %629 = vmatpush.bf16.msra.mxu0 %v614
      %630 = vmatpush.bf16.msra.mxu0 %v613
      %631 = vmatpush.bf16.msra.mxu0 %v612
      %632 = vmatpush.bf16.msra.mxu0 %v611
      %633 = vmatpush.bf16.msra.mxu0 %v610
      %634 = vmatmul.bf16.gmra.mxu0 %v576
      %v635 = vpop.f32.mrf.mxu0
      %v636 = vadd.f32 0.0, %v635
      %v637 = vpop.f32.mrf.mxu0
      %638 = vdwg.mxu0
      %v639 = vadd.f32 %v556, %v636
      %v640 = vld [vmem:[%s2] sm:$0x1]
      %v642 = vperm.slane %v640, 0
      %v644 = vadd.f32 %v639, %v642
      %v645 = vmax.f32 %v644, 0.0
      %v646 = vld [vmem:[%s369] sm:$0xff]
      %v647 = vld [vmem:[%s4] sm:$0xf]
      %v648 = vld [vmem:[%s5] sm:$0x1]
      %v650 = vperm.slane %v648, 0
      %vm652 = vcmask 31744
      %v654 = vsel %vm652, %v646, 0
      %vm656 = vcmask 1043456
      %v658 = vsel %vm656, %v647, 0
      %660 = vmatpush.msra.mxu0 0.0
      %661 = vmatpush.msra.mxu0 0.0
      %662 = vmatpush.msra.mxu0 0.0
      %663 = vmatpush.msra.mxu0 0.0
      %664 = vmatpush.msra.mxu0 0.0
      %665 = vmatpush.msra.mxu0 0.0
      %666 = vmatpush.msra.mxu0 0.0
      %667 = vmatpush.msra.mxu0 0.0
      %668 = vmatpush.msra.mxu0 0.0
      %669 = vmatpush.msra.mxu0 0.0
      %670 = vmatpush.msra.mxu0 0.0
      %671 = vmatpush.msra.mxu0 0.0
      %672 = vmatpush.msra.mxu0 0.0
      %673 = vmatpush.msra.mxu0 0.0
      %674 = vmatpush.msra.mxu0 0.0
      %675 = vmatpush.msra.mxu0 %v658
      %676 = vmatmul.f32.gmra.mxu0 %v654
      %v677 = vpop.f32.mrf.mxu0
      %v678 = vadd.f32 %v650, %v677
      %679 = vdwg.mxu0
      %v680 = vadd.f32 %v645, %v678
      %v681 = vpack.c.bf16 %v680, %v680
      %682 = vst [vmem:[%s376] sm:$0xf] %v681
      %v683 = vld [vmem:[%s379] sm:$0x1]
      %v684 = vrot.slane %v680, 4
      %v685 = vadd.f32 %v680, %v684
      %v686 = vrot.slane %v685, 2
      %v687 = vadd.f32 %v685, %v686
      %v688 = vrot.slane %v687, 1
      %v689 = vadd.f32 %v687, %v688
      %v690 = vadd.f32 %v683, %v689
      %691 = vst [vmem:[%s379] sm:$0x1] %v690
      %v692 = vld [vmem:[%s382] sm:$0x1]
      %v693 = vmul.f32 %v680, %v680
      %v694 = vrot.slane %v693, 4
      %v695 = vadd.f32 %v693, %v694
      %v696 = vrot.slane %v695, 2
      %v697 = vadd.f32 %v695, %v696
      %v698 = vrot.slane %v697, 1
      %v699 = vadd.f32 %v697, %v698
      %v700 = vadd.f32 %v692, %v699
      %701 = vst [vmem:[%s382] sm:$0x1] %v700
      %p702 = scmp.lt.s32.totalorder %s24, 1
      %s703 = scalar_select %p702, %s24, 1
      %p704 = scmp.lt.s32.totalorder %s25, 0
      %s705 = scalar_select %p704, %s25, 0
      %s706 = sadd.s32 %s705, %s703
      %s707 = smul.addr %s706, 4
      %s708 = scalar_lea.vmem %s6, %s707
      %p709 = scmp.lt.s32.totalorder %s24, 1
      %s710 = scalar_select %p709, %s24, 1
      %s711 = scalar_lea.vmem %s7, %s710
      %p712 = scmp.lt.s32.totalorder %s24, 1
      %s713 = scalar_select %p712, %s24, 1
      %s714 = scalar_lea.vmem %s8, %s713
      // Predicated region
      $region49: #{hr_temporal_block_forward.4} parent=43 // pred_check
        %p715 = pneg %p192
      $region50: #{hr_temporal_block_forward.4} parent=43 // pred_check_branch
        %717 = sbr.rel (%p715) target = $region52
      $region51: #{hr_temporal_block_forward.4} parent=43 // pred_region
        _
      $region52: #{hr_temporal_block_forward.4} parent=43 // pred_fallthru
        _
      // Predicated region
      $region53: #{hr_temporal_block_forward.4} parent=43 // pred_check
        %p718 = pneg %p218
      $region54: #{hr_temporal_block_forward.4} parent=43 // pred_check_branch
        %720 = sbr.rel (%p718) target = $region56
      $region55: #{hr_temporal_block_forward.4} parent=43 // pred_region
        _
      $region56: #{hr_temporal_block_forward.4} parent=43 // pred_fallthru
        _
      // Predicated region
      $region57: #{hr_temporal_block_forward.4} parent=43 // pred_check
        %p721 = pneg %p244
      $region58: #{hr_temporal_block_forward.4} parent=43 // pred_check_branch
        %723 = sbr.rel (%p721) target = $region60
      $region59: #{hr_temporal_block_forward.4} parent=43 // pred_region
        _
      $region60: #{hr_temporal_block_forward.4} parent=43 // pred_fallthru
        _
    $region44: #{hr_temporal_block_forward.4} parent=5 // pred_fallthru
      _
    %p724 = scmp.le.s32.totalorder 2, %s15
    // Predicated region
    $region61: #{hr_temporal_block_forward.4} parent=5 // pred_check
      %p725 = pneg %p724
    $region62: #{hr_temporal_block_forward.4} parent=5 // pred_check_branch
      %727 = sbr.rel (%p725) target = $region64
    $region63: #{hr_temporal_block_forward.4} parent=5 // pred_region
      %s728 = ssub.s32 %s15, 2
      // Predicated region
      $region65: #{hr_temporal_block_forward.4} parent=63 // pred_check
        %p729 = pneg %p198
      $region66: #{hr_temporal_block_forward.4} parent=63 // pred_check_branch
        %731 = sbr.rel (%p729) target = $region68
      $region67: #{hr_temporal_block_forward.4} parent=63 // pred_region
        %p732 = scmp.lt.s32.totalorder %s26, 1
        %s733 = scalar_select %p732, %s26, 1
        %p734 = scmp.lt.s32.totalorder %s27, 0
        %s735 = scalar_select %p734, %s27, 0
        %s736 = sadd.s32 %s735, %s733
        %s737 = smul.addr %s736, 4
        %s738 = scalar_lea.vmem %s6, %s737
      $region68: #{hr_temporal_block_forward.4} parent=63 // pred_fallthru
        _
      // Predicated region
      $region69: #{hr_temporal_block_forward.4} parent=63 // pred_check
        %p739 = pneg %p224
      $region70: #{hr_temporal_block_forward.4} parent=63 // pred_check_branch
        %741 = sbr.rel (%p739) target = $region72
      $region71: #{hr_temporal_block_forward.4} parent=63 // pred_region
        %p742 = scmp.lt.s32.totalorder %s26, 1
        %s743 = scalar_select %p742, %s26, 1
        %s744 = scalar_lea.vmem %s7, %s743
      $region72: #{hr_temporal_block_forward.4} parent=63 // pred_fallthru
        _
      // Predicated region
      $region73: #{hr_temporal_block_forward.4} parent=63 // pred_check
        %p745 = pneg %p250
      $region74: #{hr_temporal_block_forward.4} parent=63 // pred_check_branch
        %747 = sbr.rel (%p745) target = $region76
      $region75: #{hr_temporal_block_forward.4} parent=63 // pred_region
        %p748 = scmp.lt.s32.totalorder %s26, 1
        %s749 = scalar_select %p748, %s26, 1
        %s750 = scalar_lea.vmem %s8, %s749
      $region76: #{hr_temporal_block_forward.4} parent=63 // pred_fallthru
        _
    $region64: #{hr_temporal_block_forward.4} parent=5 // pred_fallthru
      _
  $region6: #{hr_temporal_block_forward.4} parent=0 // loop_footer
    %s19 = sadd.s32 1, %s15
  $region7: #{hr_temporal_block_forward.4} parent=0 // loop_footer_branch
    %14 = sbr.rel target = $region3
  $region8: #{hr_temporal_block_forward.4} parent=0 // loop_exit
    _

</llo_original>
